<compile_context>
chip_gen: v7x
topology: tpu7x:2x2x1
jax: 0.10.0
libtpu: 0.0.40
codegen_flags: <defaults>
</compile_context>

<pallas_src>
import jax
import jax.numpy as jnp
from jax.experimental import pallas as pl
from jax.experimental.pallas import tpu as pltpu


# ----------------------------------------------------------------------------
# host-side helpers
# ----------------------------------------------------------------------------
def _patchify(x_im, patch):
    """(B, 1, D, H, W) NCDHW -> (B, P, patch**3) rows of flattened patches."""
    B, Cin, D, H, W = x_im.shape
    assert Cin == 1
    p = patch
    assert D % p == 0 and H % p == 0 and W % p == 0, \
        "spatial dims must be divisible by patch"
    xv = x_im.reshape(B, D // p, p, H // p, p, W // p, p)
    xv = xv.transpose(0, 1, 3, 5, 2, 4, 6).reshape(B, -1, p * p * p)
    return xv.astype(jnp.float32), xv.shape[1]


def _choose_tile_p(P, max_tile=512):
    """Largest patch-row tile: whole P if small, else a multiple-of-16 divisor."""
    if P <= max_tile:
        return P                      # block dim == full dim: always legal
    start = max_tile - (max_tile % 16)
    for tile in range(start, 0, -16):
        if P % tile == 0:
            return tile
    return P  # TODO(synk): no multiple-of-16 divisor; fall back to whole-P block


def _vmem_limit_bytes(tile_p, K, C, T, H, nc_pad, F):
    bf16, f32 = 2, 4
    est = (
        2 * tile_p * K * bf16                                   # xp, double-buffered
        + 2 * K * C * bf16                                      # w_img
        + 2 * (F * T + (C + T) * H + (C + T + H) * nc_pad) * f32  # small weights
        + 4 * tile_p * C * f32                                  # feat temporaries
        + (1 << 20)                                             # slack
    )
    # stay well under v7x's 64 MiB physical VMEM per TensorCore
    return int(min(40 * 1024 * 1024, max(8 * 1024 * 1024, 2 * est)))


# ----------------------------------------------------------------------------
# fused forward
# ----------------------------------------------------------------------------
def backbone_ensemble_forward(x_im, x_tab, params, *, patch=8, tile_p=None):
    B = x_im.shape[0]
    xp, P = _patchify(x_im, patch)                 # (B, P, K)
    K = xp.shape[-1]
    C = params["w_img"].shape[-1]                  # pooled_dim
    F = params["w_tab"].shape[0]
    T = params["w_tab"].shape[-1]                  # tab_dim
    H = params["wm_i"].shape[-1]                   # hidden_dim
    NC = params["wc_i"].shape[-1]
    NC_PAD = max(128, ((NC + 127) // 128) * 128)   # lane-dense output

    TILE_P = tile_p or _choose_tile_p(P)
    assert P % TILE_P == 0
    npt = P // TILE_P
    inv_P = 1.0 / float(P)

    # ---- host-side weight packing (layout plumbing, not compute) -----------
    # fused multimodal projection:  [x_i | x_t] @ wm
    wm = jnp.concatenate([params["wm_i"], params["wm_t"]], axis=0)           # (C+T, H)
    # fused + pre-scaled classifier heads: [x_i | x_t | x_m0] @ wc, / 3 baked in
    wc = jnp.concatenate(
        [params["wc_i"], params["wc_t"], params["wc_m"]], axis=0) / 3.0      # (C+T+H, NC)
    wc = jnp.pad(wc, ((0, 0), (0, NC_PAD - NC)))                             # (C+T+H, NC_PAD)
    bc = (params["bc_i"] + params["bc_t"] + params["bc_m"]) / 3.0
    bc = jnp.pad(bc, ((0, 0), (0, NC_PAD - NC)))                             # (1, NC_PAD)

    xp_bf = xp.astype(jnp.bfloat16)                                          # big operand -> bf16
    w_img_bf = params["w_img"].astype(jnp.bfloat16)
    xt3 = x_tab.astype(jnp.float32).reshape(B, 1, F)

    f32 = jnp.float32

    def kernel(xp_ref, w_img_ref, b_img_ref, xt_ref, w_tab_ref, b_tab_ref,
               wm_ref, bm_ref, wc_ref, bc_ref, out_ref, z_ref):
        p = pl.program_id(1)

        @pl.when(p == 0)
        def _init():
            z_ref[...] = jnp.zeros_like(z_ref)

        # ---- encoder_imaging (stand-in: patch-linear + ReLU), bf16 MXU ------
        feat = jnp.dot(xp_ref[0], w_img_ref[...], preferred_element_type=f32)
        feat = jnp.maximum(feat + b_img_ref[...], 0.0)            # (TILE_P, C) f32
        # ---- F.adaptive_avg_pool3d(...,(1,1,1)).flatten(1): running sum -----
        z_ref[:, :C] += jnp.sum(feat, axis=0, keepdims=True)

        @pl.when(p == npt - 1)
        def _final():
            # finish the mean pool -> x_i, kept in the fused feature slab
            x_i = z_ref[:, :C] * inv_P
            z_ref[:, :C] = x_i
            # encoder_tabular stand-in (missing_tabular=False branch)
            x_t = jnp.maximum(
                jnp.dot(xt_ref[0], w_tab_ref[...], preferred_element_type=f32)
                + b_tab_ref[...], 0.0)                            # (1, T)
            z_ref[:, C:C + T] = x_t
            # encoder_multimodal CLS-token stand-in: tanh([x_i|x_t] @ wm + bm)
            x_m0 = jnp.tanh(
                jnp.dot(z_ref[:, :C + T], wm_ref[...], preferred_element_type=f32)
                + bm_ref[...])                                    # (1, H)
            z_ref[:, C + T:] = x_m0
            # fused classifier heads + ensemble average (1/3 baked into wc/bc)
            out = jnp.dot(z_ref[...], wc_ref[...],
                          preferred_element_type=f32) + bc_ref[...]
            out_ref[0] = out.astype(out_ref.dtype)

    grid_spec = pltpu.PrefetchScalarGridSpec(
        num_scalar_prefetch=0,
        grid=(B, npt),
        in_specs=[
            pl.BlockSpec((1, TILE_P, K), lambda b, p: (b, p, 0)),      # patches (bf16)
            pl.BlockSpec((K, C), lambda b, p: (0, 0)),                 # w_img (bf16)
            pl.BlockSpec((1, C), lambda b, p: (0, 0)),                 # b_img
            pl.BlockSpec((1, 1, F), lambda b, p: (b, 0, 0)),           # x_tab row
            pl.BlockSpec((F, T), lambda b, p: (0, 0)),                 # w_tab
            pl.BlockSpec((1, T), lambda b, p: (0, 0)),                 # b_tab
            pl.BlockSpec((C + T, H), lambda b, p: (0, 0)),             # wm (stacked)
            pl.BlockSpec((1, H), lambda b, p: (0, 0)),                 # bm
            pl.BlockSpec((C + T + H, NC_PAD), lambda b, p: (0, 0)),    # wc (stacked/padded)
            pl.BlockSpec((1, NC_PAD), lambda b, p: (0, 0)),            # bc (fused/padded)
        ],
        out_specs=pl.BlockSpec((1, 1, NC_PAD), lambda b, p: (b, 0, 0)),
        scratch_shapes=[pltpu.VMEM((1, C + T + H), jnp.float32)],      # [x_i|x_t|x_m0] slab
    )

    out = pl.pallas_call(
        kernel,
        out_shape=jax.ShapeDtypeStruct((B, 1, NC_PAD), jnp.float32),
        grid_spec=grid_spec,
        compiler_params=pltpu.CompilerParams(
            dimension_semantics=("parallel", "arbitrary"),
            vmem_limit_bytes=_vmem_limit_bytes(TILE_P, K, C, T, H, NC_PAD, F),
        ),
    )(xp_bf, w_img_bf, params["b_img"], xt3, params["w_tab"], params["b_tab"],
      wm, params["bm"], wc, bc)

    return out.reshape(B, NC_PAD)[:, :NC]


# ----------------------------------------------------------------------------
# plain-JAX reference (identical math; first matmul also bf16 to match kernel)
# ----------------------------------------------------------------------------
def reference_forward(x_im, x_tab, params, *, patch=8):
    B = x_im.shape[0]
    xp, P = _patchify(x_im, patch)
    K = xp.shape[-1]
    feat = jnp.dot(xp.reshape(B * P, K).astype(jnp.bfloat16),
                   params["w_img"].astype(jnp.bfloat16),
                   preferred_element_type=jnp.float32)
    feat = jnp.maximum(feat + params["b_img"], 0.0)
    x_i = feat.reshape(B, P, -1).mean(axis=1)
    x_t = jnp.maximum(x_tab.astype(jnp.float32) @ params["w_tab"] + params["b_tab"], 0.0)
    x_m0 = jnp.tanh(x_i @ params["wm_i"] + x_t @ params["wm_t"] + params["bm"])
    out_i = x_i @ params["wc_i"] + params["bc_i"]
    out_t = x_t @ params["wc_t"] + params["bc_t"]
    out_m = x_m0 @ params["wc_m"] + params["bc_m"]
    return (out_i + out_t + out_m) / 3.0


def init_params(key, *, patch=8, pooled_dim=128, tab_dim=128, hidden_dim=128,
                num_tab_features=32, num_classes=4):
    K = patch ** 3
    ks = jax.random.split(key, 13)
    n = lambda k, s: (0.1 * jax.random.normal(k, s)).astype(jnp.float32)
    return {
        "w_img": n(ks[0], (K, pooled_dim)),            "b_img": n(ks[1], (1, pooled_dim)),
        "w_tab": n(ks[2], (num_tab_features, tab_dim)), "b_tab": n(ks[3], (1, tab_dim)),
        "wm_i": n(ks[4], (pooled_dim, hidden_dim)),
        "wm_t": n(ks[5], (tab_dim, hidden_dim)),
        "bm":   n(ks[6], (1, hidden_dim)),
        "wc_i": n(ks[7], (pooled_dim, num_classes)),   "bc_i": n(ks[8], (1, num_classes)),
        "wc_t": n(ks[9], (tab_dim, num_classes)),      "bc_t": n(ks[10], (1, num_classes)),
        "wc_m": n(ks[11], (hidden_dim, num_classes)),  "bc_m": n(ks[12], (1, num_classes)),
    }


if __name__ == "__main__":
    key = jax.random.PRNGKey(0)
    k_im, k_tab, k_par = jax.random.split(key, 3)

    B, D = 2, 16
    x_im = jax.random.normal(k_im, (B, 1, D, D, D), dtype=jnp.float32)   # NCDHW
    x_tab = jax.random.normal(k_tab, (B, 32), dtype=jnp.float32)
    params = init_params(k_par)

    out = jax.block_until_ready(backbone_ensemble_forward(x_im, x_tab, params))
    ref = jax.block_until_ready(reference_forward(x_im, x_tab, params))

    assert out.shape == (B, 4), out.shape
    assert jnp.allclose(out, ref, atol=2e-2, rtol=2e-2), (out, ref)
    print("KERNEL_OK")
</pallas_src>

<mosaic_0001>
module attributes {stable_mosaic.version = 11 : i64} {
  func.func @kernel(%arg0: i32, %arg1: i32, %arg2: memref<1x8x512xbf16, #tpu.memory_space<vmem>>, %arg3: memref<512x128xbf16, #tpu.memory_space<vmem>>, %arg4: memref<1x128xf32, #tpu.memory_space<vmem>>, %arg5: memref<1x1x32xf32, #tpu.memory_space<vmem>>, %arg6: memref<32x128xf32, #tpu.memory_space<vmem>>, %arg7: memref<1x128xf32, #tpu.memory_space<vmem>>, %arg8: memref<256x128xf32, #tpu.memory_space<vmem>>, %arg9: memref<1x128xf32, #tpu.memory_space<vmem>>, %arg10: memref<384x128xf32, #tpu.memory_space<vmem>>, %arg11: memref<1x128xf32, #tpu.memory_space<vmem>>, %arg12: memref<1x1x128xf32, #tpu.memory_space<vmem>>, %arg13: memref<1x384xf32, #tpu.memory_space<vmem>>) attributes {dimension_semantics = [#tpu.dimension_semantics<parallel>, #tpu.dimension_semantics<arbitrary>], iteration_bounds = array<i64: 2, 1>, scalar_prefetch = 0 : i64, scratch_operands = 1 : i64, tpu.core_type = #tpu.core_type<tc>, window_params = [{transform_indices = @transform_0, window_bounds = array<i64: 1, 8, 512>}, {pipeline_mode = #tpu.pipeline_mode<synchronous>, transform_indices = @transform_1, window_bounds = array<i64: 512, 128>}, {pipeline_mode = #tpu.pipeline_mode<synchronous>, transform_indices = @transform_2, window_bounds = array<i64: 1, 128>}, {transform_indices = @transform_3, window_bounds = array<i64: 1, 1, 32>}, {pipeline_mode = #tpu.pipeline_mode<synchronous>, transform_indices = @transform_4, window_bounds = array<i64: 32, 128>}, {pipeline_mode = #tpu.pipeline_mode<synchronous>, transform_indices = @transform_5, window_bounds = array<i64: 1, 128>}, {pipeline_mode = #tpu.pipeline_mode<synchronous>, transform_indices = @transform_6, window_bounds = array<i64: 256, 128>}, {pipeline_mode = #tpu.pipeline_mode<synchronous>, transform_indices = @transform_7, window_bounds = array<i64: 1, 128>}, {pipeline_mode = #tpu.pipeline_mode<synchronous>, transform_indices = @transform_8, window_bounds = array<i64: 384, 128>}, {pipeline_mode = #tpu.pipeline_mode<synchronous>, transform_indices = @transform_9, window_bounds = array<i64: 1, 128>}, {transform_indices = @transform_10, window_bounds = array<i64: 1, 1, 128>}]} {
    %c0_i32 = arith.constant 0 : i32
    %0 = arith.cmpi eq, %arg1, %c0_i32 : i32
    %1 = arith.extui %0 : i1 to i32
    %c0_i32_0 = arith.constant 0 : i32
    %2 = arith.cmpi ne, %1, %c0_i32_0 : i32
    scf.if %2 {
      %cst_15 = arith.constant 0.000000e+00 : f32
      %20 = vector.broadcast %cst_15 : f32 to vector<1x384xf32>
      %c0_16 = arith.constant 0 : index
      %c0_17 = arith.constant 0 : index
      %21 = vector.load %arg13[%c0_16, %c0_17] : memref<1x384xf32, #tpu.memory_space<vmem>>, vector<1x384xf32>
      tpu.vector_store %arg13[%c0_16, %c0_17], %20 {strides = array<i32>} : memref<1x384xf32, #tpu.memory_space<vmem>>, vector<1x384xf32>,
    } else {
    }
    %c0 = arith.constant 0 : index
    %c0_1 = arith.constant 0 : index
    %c0_2 = arith.constant 0 : index
    %3 = vector.load %arg2[%c0, %c0_1, %c0_2] : memref<1x8x512xbf16, #tpu.memory_space<vmem>>, vector<1x8x512xbf16>
    %4 = vector.shape_cast %3 : vector<1x8x512xbf16> to vector<8x512xbf16>
    %c0_3 = arith.constant 0 : index
    %c0_4 = arith.constant 0 : index
    %5 = vector.load %arg3[%c0_3, %c0_4] : memref<512x128xbf16, #tpu.memory_space<vmem>>, vector<512x128xbf16>
    %cst = arith.constant dense<0.000000e+00> : vector<8x128xf32>
    %6 = tpu.matmul %4, %5, %cst {dimension_numbers = #tpu.dot_dimension_numbers<[1], [0], [0], [1], [0, 0, 1, 1], [], []>} : vector<8x512xbf16>, vector<512x128xbf16>, vector<8x128xf32> -> vector<8x128xf32>
    %c0_5 = arith.constant 0 : index
    %c0_6 = arith.constant 0 : index
    %7 = vector.load %arg4[%c0_5, %c0_6] : memref<1x128xf32, #tpu.memory_space<vmem>>, vector<1x128xf32>
    %8 = vector.broadcast %7 : vector<1x128xf32> to vector<8x128xf32>
    %9 = arith.addf %6, %8 : vector<8x128xf32>
    %cst_7 = arith.constant 0.000000e+00 : f32
    %10 = vector.broadcast %cst_7 : f32 to vector<8x128xf32>
    %11 = arith.maximumf %9, %10 : vector<8x128xf32>
    %c0_8 = arith.constant 0 : index
    %c0_9 = arith.constant 0 : index
    %12 = vector.load %arg13[%c0_8, %c0_9] : memref<1x384xf32, #tpu.memory_space<vmem>>, vector<1x128xf32>
    %cst_10 = arith.constant dense<0.000000e+00> : vector<128xf32>
    %13 = vector.multi_reduction <add>, %11, %cst_10 [0] : vector<8x128xf32> to vector<128xf32>
    %14 = vector.shape_cast %13 : vector<128xf32> to vector<1x128xf32>
    %15 = arith.addf %12, %14 : vector<1x128xf32>
    %c0_11 = arith.constant 0 : index
    %c0_12 = arith.constant 0 : index
    %16 = vector.load %arg13[%c0_11, %c0_12] : memref<1x384xf32, #tpu.memory_space<vmem>>, vector<1x128xf32>
    tpu.vector_store %arg13[%c0_11, %c0_12], %15 {strides = array<i32>} : memref<1x384xf32, #tpu.memory_space<vmem>>, vector<1x128xf32>,
    %c0_i32_13 = arith.constant 0 : i32
    %17 = arith.cmpi eq, %arg1, %c0_i32_13 : i32
    %18 = arith.extui %17 : i1 to i32
    %c0_i32_14 = arith.constant 0 : i32
    %19 = arith.cmpi ne, %18, %c0_i32_14 : i32
    scf.if %19 {
      %c0_15 = arith.constant 0 : index
      %c0_16 = arith.constant 0 : index
      %20 = vector.load %arg13[%c0_15, %c0_16] : memref<1x384xf32, #tpu.memory_space<vmem>>, vector<1x128xf32>
      %cst_17 = arith.constant 1.250000e-01 : f32
      %21 = vector.broadcast %cst_17 : f32 to vector<1x128xf32>
      %22 = arith.mulf %20, %21 : vector<1x128xf32>
      %c0_18 = arith.constant 0 : index
      %c0_19 = arith.constant 0 : index
      %23 = vector.load %arg13[%c0_18, %c0_19] : memref<1x384xf32, #tpu.memory_space<vmem>>, vector<1x128xf32>
      tpu.vector_store %arg13[%c0_18, %c0_19], %22 {strides = array<i32>} : memref<1x384xf32, #tpu.memory_space<vmem>>, vector<1x128xf32>,
      %c0_20 = arith.constant 0 : index
      %c0_21 = arith.constant 0 : index
      %c0_22 = arith.constant 0 : index
      %24 = vector.load %arg5[%c0_20, %c0_21, %c0_22] : memref<1x1x32xf32, #tpu.memory_space<vmem>>, vector<1x1x32xf32>
      %25 = vector.shape_cast %24 : vector<1x1x32xf32> to vector<1x32xf32>
      %c0_23 = arith.constant 0 : index
      %c0_24 = arith.constant 0 : index
      %26 = vector.load %arg6[%c0_23, %c0_24] : memref<32x128xf32, #tpu.memory_space<vmem>>, vector<32x128xf32>
      %cst_25 = arith.constant dense<0.000000e+00> : vector<1x128xf32>
      %27 = tpu.matmul %25, %26, %cst_25 {dimension_numbers = #tpu.dot_dimension_numbers<[1], [0], [0], [1], [0, 0, 1, 1], [], []>} : vector<1x32xf32>, vector<32x128xf32>, vector<1x128xf32> -> vector<1x128xf32>
      %c0_26 = arith.constant 0 : index
      %c0_27 = arith.constant 0 : index
      %28 = vector.load %arg7[%c0_26, %c0_27] : memref<1x128xf32, #tpu.memory_space<vmem>>, vector<1x128xf32>
      %29 = arith.addf %27, %28 : vector<1x128xf32>
      %cst_28 = arith.constant 0.000000e+00 : f32
      %30 = vector.broadcast %cst_28 : f32 to vector<1x128xf32>
      %31 = arith.maximumf %29, %30 : vector<1x128xf32>
      %c0_29 = arith.constant 0 : index
      %c128 = arith.constant 128 : index
      %32 = vector.load %arg13[%c0_29, %c128] : memref<1x384xf32, #tpu.memory_space<vmem>>, vector<1x128xf32>
      tpu.vector_store %arg13[%c0_29, %c128], %31 {strides = array<i32>} : memref<1x384xf32, #tpu.memory_space<vmem>>, vector<1x128xf32>,
      %c0_30 = arith.constant 0 : index
      %c0_31 = arith.constant 0 : index
      %33 = vector.load %arg13[%c0_30, %c0_31] : memref<1x384xf32, #tpu.memory_space<vmem>>, vector<1x256xf32>
      %c0_32 = arith.constant 0 : index
      %c0_33 = arith.constant 0 : index
      %34 = vector.load %arg8[%c0_32, %c0_33] : memref<256x128xf32, #tpu.memory_space<vmem>>, vector<256x128xf32>
      %cst_34 = arith.constant dense<0.000000e+00> : vector<1x128xf32>
      %35 = tpu.matmul %33, %34, %cst_34 {dimension_numbers = #tpu.dot_dimension_numbers<[1], [0], [0], [1], [0, 0, 1, 1], [], []>} : vector<1x256xf32>, vector<256x128xf32>, vector<1x128xf32> -> vector<1x128xf32>
      %c0_35 = arith.constant 0 : index
      %c0_36 = arith.constant 0 : index
      %36 = vector.load %arg9[%c0_35, %c0_36] : memref<1x128xf32, #tpu.memory_space<vmem>>, vector<1x128xf32>
      %37 = arith.addf %35, %36 : vector<1x128xf32>
      %38 = math.tanh %37 : vector<1x128xf32>
      %c0_37 = arith.constant 0 : index
      %c256 = arith.constant 256 : index
      %39 = vector.load %arg13[%c0_37, %c256] : memref<1x384xf32, #tpu.memory_space<vmem>>, vector<1x128xf32>
      tpu.vector_store %arg13[%c0_37, %c256], %38 {strides = array<i32>} : memref<1x384xf32, #tpu.memory_space<vmem>>, vector<1x128xf32>,
      %c0_38 = arith.constant 0 : index
      %c0_39 = arith.constant 0 : index
      %40 = vector.load %arg13[%c0_38, %c0_39] : memref<1x384xf32, #tpu.memory_space<vmem>>, vector<1x384xf32>
      %c0_40 = arith.constant 0 : index
      %c0_41 = arith.constant 0 : index
      %41 = vector.load %arg10[%c0_40, %c0_41] : memref<384x128xf32, #tpu.memory_space<vmem>>, vector<384x128xf32>
      %cst_42 = arith.constant dense<0.000000e+00> : vector<1x128xf32>
      %42 = tpu.matmul %40, %41, %cst_42 {dimension_numbers = #tpu.dot_dimension_numbers<[1], [0], [0], [1], [0, 0, 1, 1], [], []>} : vector<1x384xf32>, vector<384x128xf32>, vector<1x128xf32> -> vector<1x128xf32>
      %c0_43 = arith.constant 0 : index
      %c0_44 = arith.constant 0 : index
      %43 = vector.load %arg11[%c0_43, %c0_44] : memref<1x128xf32, #tpu.memory_space<vmem>>, vector<1x128xf32>
      %44 = arith.addf %42, %43 : vector<1x128xf32>
      %c0_45 = arith.constant 0 : index
      %c0_46 = arith.constant 0 : index
      %c0_47 = arith.constant 0 : index
      %45 = vector.load %arg12[%c0_45, %c0_46, %c0_47] : memref<1x1x128xf32, #tpu.memory_space<vmem>>, vector<1x1x128xf32>
      %46 = vector.shape_cast %45 : vector<1x1x128xf32> to vector<1x128xf32>
      %47 = vector.shape_cast %44 : vector<1x128xf32> to vector<1x1x128xf32>
      tpu.vector_store %arg12[%c0_45, %c0_46, %c0_47], %47 {strides = array<i32>} : memref<1x1x128xf32, #tpu.memory_space<vmem>>, vector<1x1x128xf32>,
    } else {
    }
    return
  }
  func.func @transform_0(%arg0: i32, %arg1: i32) -> (i32, i32, i32) {
    %c0_i32 = arith.constant 0 : i32
    %c0_i32_0 = arith.constant 0 : i32
    return %arg0, %arg1, %c0_i32 : i32, i32, i32
  }
  func.func @transform_1(%arg0: i32, %arg1: i32) -> (i32, i32) {
    %c0_i32 = arith.constant 0 : i32
    %c0_i32_0 = arith.constant 0 : i32
    %c0_i32_1 = arith.constant 0 : i32
    return %c0_i32, %c0_i32_0 : i32, i32
  }
  func.func @transform_2(%arg0: i32, %arg1: i32) -> (i32, i32) {
    %c0_i32 = arith.constant 0 : i32
    %c0_i32_0 = arith.constant 0 : i32
    %c0_i32_1 = arith.constant 0 : i32
    return %c0_i32, %c0_i32_0 : i32, i32
  }
  func.func @transform_3(%arg0: i32, %arg1: i32) -> (i32, i32, i32) {
    %c0_i32 = arith.constant 0 : i32
    %c0_i32_0 = arith.constant 0 : i32
    %c0_i32_1 = arith.constant 0 : i32
    return %arg0, %c0_i32, %c0_i32_0 : i32, i32, i32
  }
  func.func @transform_4(%arg0: i32, %arg1: i32) -> (i32, i32) {
    %c0_i32 = arith.constant 0 : i32
    %c0_i32_0 = arith.constant 0 : i32
    %c0_i32_1 = arith.constant 0 : i32
    return %c0_i32, %c0_i32_0 : i32, i32
  }
  func.func @transform_5(%arg0: i32, %arg1: i32) -> (i32, i32) {
    %c0_i32 = arith.constant 0 : i32
    %c0_i32_0 = arith.constant 0 : i32
    %c0_i32_1 = arith.constant 0 : i32
    return %c0_i32, %c0_i32_0 : i32, i32
  }
  func.func @transform_6(%arg0: i32, %arg1: i32) -> (i32, i32) {
    %c0_i32 = arith.constant 0 : i32
    %c0_i32_0 = arith.constant 0 : i32
    %c0_i32_1 = arith.constant 0 : i32
    return %c0_i32, %c0_i32_0 : i32, i32
  }
  func.func @transform_7(%arg0: i32, %arg1: i32) -> (i32, i32) {
    %c0_i32 = arith.constant 0 : i32
    %c0_i32_0 = arith.constant 0 : i32
    %c0_i32_1 = arith.constant 0 : i32
    return %c0_i32, %c0_i32_0 : i32, i32
  }
  func.func @transform_8(%arg0: i32, %arg1: i32) -> (i32, i32) {
    %c0_i32 = arith.constant 0 : i32
    %c0_i32_0 = arith.constant 0 : i32
    %c0_i32_1 = arith.constant 0 : i32
    return %c0_i32, %c0_i32_0 : i32, i32
  }
  func.func @transform_9(%arg0: i32, %arg1: i32) -> (i32, i32) {
    %c0_i32 = arith.constant 0 : i32
    %c0_i32_0 = arith.constant 0 : i32
    %c0_i32_1 = arith.constant 0 : i32
    return %c0_i32, %c0_i32_0 : i32, i32
  }
  func.func @transform_10(%arg0: i32, %arg1: i32) -> (i32, i32, i32) {
    %c0_i32 = arith.constant 0 : i32
    %c0_i32_0 = arith.constant 0 : i32
    %c0_i32_1 = arith.constant 0 : i32
    return %arg0, %c0_i32, %c0_i32_0 : i32, i32, i32
  }
}

</mosaic_0001>

<llo_original>
// kernel: tpu_custom_call.1
$region0: #{tpu_custom_call.1}
  #allocation0 [shape = 'u32[]', space=smem, size = 0x4, offset = 0x4, fixed_abs, tag = 'smem constant byte address 0x4 - core index']
  #allocation1 [shape = 'u32[144,128]{1,0:T(1,128)}', space=vmem, size = 0x12000, scoped, tag = 'internal scratch']
  #allocation2 [shape = 'f32[1,384]{1,0:T(1,128)}', space=vmem, size = 0x600, scoped, tag = 'scratch operand']
  %s0 = inlined_call_operand.hbm [shape: bf16[2,8,512], index: 0, kind: input, shape index: {}]
  %s1 = inlined_call_operand.hbm [shape: bf16[512,128], index: 1, kind: input, shape index: {}]
  %s2 = inlined_call_operand.vmem [shape: f32[1,128], index: 2, kind: input, shape index: {}]
  %s3 = inlined_call_operand.vmem [shape: f32[2,1,32], index: 3, kind: input, shape index: {}]
  %s4 = inlined_call_operand.hbm [shape: f32[32,128], index: 4, kind: input, shape index: {}]
  %s5 = inlined_call_operand.vmem [shape: f32[1,128], index: 5, kind: input, shape index: {}]
  %s6 = inlined_call_operand.hbm [shape: f32[256,128], index: 6, kind: input, shape index: {}]
  %s7 = inlined_call_operand.vmem [shape: f32[1,128], index: 7, kind: input, shape index: {}]
  %s8 = inlined_call_operand.hbm [shape: f32[384,128], index: 8, kind: input, shape index: {}]
  %s9 = inlined_call_operand.vmem [shape: f32[1,128], index: 9, kind: input, shape index: {}]
  %s10 = inlined_call_operand.hbm [shape: f32[2,1,128], index: 10, kind: output, shape index: {}]
  %s11 = sld [smem:[#allocation0]]
  $region101: #{tpu_custom_call.1} parent=0
    _
  %s13 = ssub.s32 1, %s11
  %s14 = scalar_select 0, %s13, %s11
  $region1: #{tpu_custom_call.1} parent=0
    #allocation3 [shape = 'u8[16384]{0}', space=vmem, size = 0x4000, scoped, tag = 'input window, operand 0']
    #allocation4 [shape = 's32[2]{0}', space=sflag, size = 0x8, scoped, tag = 'scoped memory for tpu_custom_call.1']
    #allocation5 [shape = 's32[2]{0}', space=sflag, size = 0x8, scoped, tag = 'scoped memory for tpu_custom_call.1']
    #allocation6 [shape = 'u8[131072]{0}', space=vmem, size = 0x20000, scoped, tag = 'input window, operand 1, single buffered']
    #allocation7 [shape = 's32[1]{0}', space=sflag, size = 0x4, scoped, tag = 'scoped memory for tpu_custom_call.1']
    #allocation8 [shape = 'u8[16384]{0}', space=vmem, size = 0x4000, scoped, tag = 'input window, operand 4, single buffered']
    #allocation9 [shape = 'u8[131072]{0}', space=vmem, size = 0x20000, scoped, tag = 'input window, operand 6, single buffered']
    #allocation10 [shape = 's32[1]{0}', space=sflag, size = 0x4, scoped, tag = 'scoped memory for tpu_custom_call.1']
    #allocation11 [shape = 'u8[196608]{0}', space=vmem, size = 0x30000, scoped, tag = 'input window, operand 8, single buffered']
    #allocation12 [shape = 'u8[1024]{0}', space=vmem, size = 0x400, scoped, tag = 'output window, operand 0']
    %15 = vsyncpa [#allocation4], 0
    %s16 = scalar_lea.sflag [#allocation4], 1
    %17 = vsyncpa %s16, 0
    %18 = vsyncpa [#allocation7], 0
    %19 = vsyncpa [#allocation10], 0
    %20 = vsyncpa [#allocation5], 0
    %s21 = scalar_lea.sflag [#allocation5], 1
    %22 = vsyncpa %s21, 0
    loop: start=0, step=1, limit=4
    $region2: #{tpu_custom_call.1} parent=1 // loop_pre_header
      _
    $region3: #{tpu_custom_call.1} parent=1 // loop_header
      %s24 = sphi 0, %s28
      %p25 = scmp.ge.s32.totalorder %s24, 4
      %s31 = sphi 0, %s43
      %s32 = sphi 0, %s39
      %s33 = sphi 0, %s31
      %s34 = sphi 0, %s32
      %s35 = sphi 0, %s33
      %s36 = sphi 0, %s34
      %s48 = sphi 0, %s50
      %s51 = sphi 0, %s48
      %s52 = sphi 0, %s51
      %s68 = sphi 0, %s52
      %s72 = sphi 0, %s72
      %s74 = sphi 0, %s72
      %s75 = sphi 0, %s74
      %s89 = sphi 0, %s75
      %s93 = sphi 0, %s93
      %s95 = sphi 0, %s93
      %s96 = sphi 0, %s95
      %s110 = sphi 0, %s96
      %s116 = sphi 0, %s118
      %s119 = sphi 0, %s116
      %s120 = sphi 0, %s119
      %s136 = sphi 0, %s120
      %s140 = sphi 0, %s140
      %s142 = sphi 0, %s140
      %s143 = sphi 0, %s142
      %s157 = sphi 0, %s143
      %s161 = sphi 0, %s161
      %s163 = sphi 0, %s161
      %s164 = sphi 0, %s163
      %s178 = sphi 0, %s164
      %s182 = sphi 0, %s182
      %s184 = sphi 0, %s182
      %s185 = sphi 0, %s184
      %s199 = sphi 0, %s185
      %s203 = sphi 0, %s203
      %s205 = sphi 0, %s203
      %s206 = sphi 0, %s205
      %s220 = sphi 0, %s206
      %s224 = sphi 0, %s224
      %s226 = sphi 0, %s224
      %s227 = sphi 0, %s226
      %s241 = sphi 0, %s227
      %s245 = sphi 0, %s245
      %s247 = sphi 0, %s245
      %s248 = sphi 0, %s247
      %s262 = sphi 0, %s248
      %s268 = sphi 0, %s270
      %s271 = sphi 0, %s268
      %s272 = sphi 0, %s271
      %s288 = sphi 0, %s272
    $region4: #{tpu_custom_call.1} parent=1 // loop_header_branch
      %27 = sbr.rel (%p25) target = $region8
    $region5: #{tpu_custom_call.1} parent=1 // loop_body
      %s29 = ssub.s32 %s24, 1
      %s30 = ssub.s32 %s24, 2
      %s37 = sadd.s32 1, %s32
      %p38 = scmp.ge.s32.totalorder %s37, 1
      %s39 = scalar_select %p38, 0, %s37
      %s40 = sadd.s32 1, %s31
      %s41 = scalar_select %p38, %s40, %s31
      %p42 = scmp.ge.s32.totalorder %s41, 2
      %s43 = scalar_select %p42, 0, %s41
      %s44 = ssub.s32 %s31, %s43
      %s45 = ssub.s32 %s32, %s39
      %s46 = sor.u32 %s44, %s45
      %p47 = scmp.eq.s32.totalorder %s46, 0
      %s49 = sadd.s32 %s48, 1
      %s50 = scalar_select %p47, %s48, %s49
      %p53 = pneg %p47
      %p54 = scmp.eq.s32.totalorder %s24, 1
      %p55 = por %p53, %p54
      %p56 = scmp.ne.s32.totalorder %s48, %s51
      %p57 = scmp.eq.s32.totalorder %s24, 0
      %p58 = por %p56, %p57
      %p59 = scmp.ne.s32.totalorder %s48, %s51
      %p60 = scmp.eq.s32.totalorder %s29, 1
      %p61 = por %p59, %p60
      %p62 = scmp.ne.s32.totalorder %s51, %s52
      %p63 = scmp.eq.s32.totalorder %s29, 0
      %p64 = por %p62, %p63
      %p65 = scmp.ne.s32.totalorder %s51, %s52
      %p66 = scmp.eq.s32.totalorder %s30, 1
      %p67 = por %p65, %p66
      %p69 = scmp.ne.s32.totalorder %s52, %s68
      %p70 = scmp.eq.s32.totalorder %s30, 0
      %p71 = por %p69, %p70
      %s73 = sadd.s32 %s72, 1
      %p76 = scmp.eq.s32.totalorder %s24, 1
      %p77 = scmp.ne.s32.totalorder %s72, %s74
      %p78 = scmp.eq.s32.totalorder %s24, 0
      %p79 = por %p77, %p78
      %p80 = scmp.ne.s32.totalorder %s72, %s74
      %p81 = scmp.eq.s32.totalorder %s29, 1
      %p82 = por %p80, %p81
      %p83 = scmp.ne.s32.totalorder %s74, %s75
      %p84 = scmp.eq.s32.totalorder %s29, 0
      %p85 = por %p83, %p84
      %p86 = scmp.ne.s32.totalorder %s74, %s75
      %p87 = scmp.eq.s32.totalorder %s30, 1
      %p88 = por %p86, %p87
      %p90 = scmp.ne.s32.totalorder %s75, %s89
      %p91 = scmp.eq.s32.totalorder %s30, 0
      %p92 = por %p90, %p91
      %s94 = sadd.s32 %s93, 1
      %p97 = scmp.eq.s32.totalorder %s24, 1
      %p98 = scmp.ne.s32.totalorder %s93, %s95
      %p99 = scmp.eq.s32.totalorder %s24, 0
      %p100 = por %p98, %p99
      %p101 = scmp.ne.s32.totalorder %s93, %s95
      %p102 = scmp.eq.s32.totalorder %s29, 1
      %p103 = por %p101, %p102
      %p104 = scmp.ne.s32.totalorder %s95, %s96
      %p105 = scmp.eq.s32.totalorder %s29, 0
      %p106 = por %p104, %p105
      %p107 = scmp.ne.s32.totalorder %s95, %s96
      %p108 = scmp.eq.s32.totalorder %s30, 1
      %p109 = por %p107, %p108
      %p111 = scmp.ne.s32.totalorder %s96, %s110
      %p112 = scmp.eq.s32.totalorder %s30, 0
      %p113 = por %p111, %p112
      %s114 = ssub.s32 %s31, %s43
      %p115 = scmp.eq.s32.totalorder %s114, 0
      %s117 = sadd.s32 %s116, 1
      %s118 = scalar_select %p115, %s116, %s117
      %p121 = pneg %p115
      %p122 = scmp.eq.s32.totalorder %s24, 1
      %p123 = por %p121, %p122
      %p124 = scmp.ne.s32.totalorder %s116, %s119
      %p125 = scmp.eq.s32.totalorder %s24, 0
      %p126 = por %p124, %p125
      %p127 = scmp.ne.s32.totalorder %s116, %s119
      %p128 = scmp.eq.s32.totalorder %s29, 1
      %p129 = por %p127, %p128
      %p130 = scmp.ne.s32.totalorder %s119, %s120
      %p131 = scmp.eq.s32.totalorder %s29, 0
      %p132 = por %p130, %p131
      %p133 = scmp.ne.s32.totalorder %s119, %s120
      %p134 = scmp.eq.s32.totalorder %s30, 1
      %p135 = por %p133, %p134
      %p137 = scmp.ne.s32.totalorder %s120, %s136
      %p138 = scmp.eq.s32.totalorder %s30, 0
      %p139 = por %p137, %p138
      %s141 = sadd.s32 %s140, 1
      %p144 = scmp.eq.s32.totalorder %s24, 1
      %p145 = scmp.ne.s32.totalorder %s140, %s142
      %p146 = scmp.eq.s32.totalorder %s24, 0
      %p147 = por %p145, %p146
      %p148 = scmp.ne.s32.totalorder %s140, %s142
      %p149 = scmp.eq.s32.totalorder %s29, 1
      %p150 = por %p148, %p149
      %p151 = scmp.ne.s32.totalorder %s142, %s143
      %p152 = scmp.eq.s32.totalorder %s29, 0
      %p153 = por %p151, %p152
      %p154 = scmp.ne.s32.totalorder %s142, %s143
      %p155 = scmp.eq.s32.totalorder %s30, 1
      %p156 = por %p154, %p155
      %p158 = scmp.ne.s32.totalorder %s143, %s157
      %p159 = scmp.eq.s32.totalorder %s30, 0
      %p160 = por %p158, %p159
      %s162 = sadd.s32 %s161, 1
      %p165 = scmp.eq.s32.totalorder %s24, 1
      %p166 = scmp.ne.s32.totalorder %s161, %s163
      %p167 = scmp.eq.s32.totalorder %s24, 0
      %p168 = por %p166, %p167
      %p169 = scmp.ne.s32.totalorder %s161, %s163
      %p170 = scmp.eq.s32.totalorder %s29, 1
      %p171 = por %p169, %p170
      %p172 = scmp.ne.s32.totalorder %s163, %s164
      %p173 = scmp.eq.s32.totalorder %s29, 0
      %p174 = por %p172, %p173
      %p175 = scmp.ne.s32.totalorder %s163, %s164
      %p176 = scmp.eq.s32.totalorder %s30, 1
      %p177 = por %p175, %p176
      %p179 = scmp.ne.s32.totalorder %s164, %s178
      %p180 = scmp.eq.s32.totalorder %s30, 0
      %p181 = por %p179, %p180
      %s183 = sadd.s32 %s182, 1
      %p186 = scmp.eq.s32.totalorder %s24, 1
      %p187 = scmp.ne.s32.totalorder %s182, %s184
      %p188 = scmp.eq.s32.totalorder %s24, 0
      %p189 = por %p187, %p188
      %p190 = scmp.ne.s32.totalorder %s182, %s184
      %p191 = scmp.eq.s32.totalorder %s29, 1
      %p192 = por %p190, %p191
      %p193 = scmp.ne.s32.totalorder %s184, %s185
      %p194 = scmp.eq.s32.totalorder %s29, 0
      %p195 = por %p193, %p194
      %p196 = scmp.ne.s32.totalorder %s184, %s185
      %p197 = scmp.eq.s32.totalorder %s30, 1
      %p198 = por %p196, %p197
      %p200 = scmp.ne.s32.totalorder %s185, %s199
      %p201 = scmp.eq.s32.totalorder %s30, 0
      %p202 = por %p200, %p201
      %s204 = sadd.s32 %s203, 1
      %p207 = scmp.eq.s32.totalorder %s24, 1
      %p208 = scmp.ne.s32.totalorder %s203, %s205
      %p209 = scmp.eq.s32.totalorder %s24, 0
      %p210 = por %p208, %p209
      %p211 = scmp.ne.s32.totalorder %s203, %s205
      %p212 = scmp.eq.s32.totalorder %s29, 1
      %p213 = por %p211, %p212
      %p214 = scmp.ne.s32.totalorder %s205, %s206
      %p215 = scmp.eq.s32.totalorder %s29, 0
      %p216 = por %p214, %p215
      %p217 = scmp.ne.s32.totalorder %s205, %s206
      %p218 = scmp.eq.s32.totalorder %s30, 1
      %p219 = por %p217, %p218
      %p221 = scmp.ne.s32.totalorder %s206, %s220
      %p222 = scmp.eq.s32.totalorder %s30, 0
      %p223 = por %p221, %p222
      %s225 = sadd.s32 %s224, 1
      %p228 = scmp.eq.s32.totalorder %s24, 1
      %p229 = scmp.ne.s32.totalorder %s224, %s226
      %p230 = scmp.eq.s32.totalorder %s24, 0
      %p231 = por %p229, %p230
      %p232 = scmp.ne.s32.totalorder %s224, %s226
      %p233 = scmp.eq.s32.totalorder %s29, 1
      %p234 = por %p232, %p233
      %p235 = scmp.ne.s32.totalorder %s226, %s227
      %p236 = scmp.eq.s32.totalorder %s29, 0
      %p237 = por %p235, %p236
      %p238 = scmp.ne.s32.totalorder %s226, %s227
      %p239 = scmp.eq.s32.totalorder %s30, 1
      %p240 = por %p238, %p239
      %p242 = scmp.ne.s32.totalorder %s227, %s241
      %p243 = scmp.eq.s32.totalorder %s30, 0
      %p244 = por %p242, %p243
      %s246 = sadd.s32 %s245, 1
      %p249 = scmp.eq.s32.totalorder %s24, 1
      %p250 = scmp.ne.s32.totalorder %s245, %s247
      %p251 = scmp.eq.s32.totalorder %s24, 0
      %p252 = por %p250, %p251
      %p253 = scmp.ne.s32.totalorder %s245, %s247
      %p254 = scmp.eq.s32.totalorder %s29, 1
      %p255 = por %p253, %p254
      %p256 = scmp.ne.s32.totalorder %s247, %s248
      %p257 = scmp.eq.s32.totalorder %s29, 0
      %p258 = por %p256, %p257
      %p259 = scmp.ne.s32.totalorder %s247, %s248
      %p260 = scmp.eq.s32.totalorder %s30, 1
      %p261 = por %p259, %p260
      %p263 = scmp.ne.s32.totalorder %s248, %s262
      %p264 = scmp.eq.s32.totalorder %s30, 0
      %p265 = por %p263, %p264
      %s266 = ssub.s32 %s31, %s43
      %p267 = scmp.eq.s32.totalorder %s266, 0
      %s269 = sadd.s32 %s268, 1
      %s270 = scalar_select %p267, %s268, %s269
      %p273 = pneg %p267
      %p274 = scmp.eq.s32.totalorder %s24, 1
      %p275 = por %p273, %p274
      %p276 = scmp.ne.s32.totalorder %s268, %s271
      %p277 = scmp.eq.s32.totalorder %s24, 0
      %p278 = por %p276, %p277
      %p279 = scmp.ne.s32.totalorder %s268, %s271
      %p280 = scmp.eq.s32.totalorder %s29, 1
      %p281 = por %p279, %p280
      %p282 = scmp.ne.s32.totalorder %s271, %s272
      %p283 = scmp.eq.s32.totalorder %s29, 0
      %p284 = por %p282, %p283
      %p285 = scmp.ne.s32.totalorder %s271, %s272
      %p286 = scmp.eq.s32.totalorder %s30, 1
      %p287 = por %p285, %p286
      %p289 = scmp.ne.s32.totalorder %s272, %s288
      %p290 = scmp.eq.s32.totalorder %s30, 0
      %p291 = por %p289, %p290
      %p292 = scmp.le.s32.totalorder 1, %s24
      %p293 = scmp.lt.s32.totalorder %s24, 3
      %p294 = pnand %p292, %p293
      %p295 = pneg %p294
      // Predicated region
      $region9: #{tpu_custom_call.1} parent=5 // pred_check
        _
      $region10: #{tpu_custom_call.1} parent=5 // pred_check_branch
        %297 = sbr.rel (%p294) target = $region12
      $region11: #{tpu_custom_call.1} parent=5 // pred_region
        %s298 = ssub.s32 %s24, 1
        // Predicated region
        $region13: #{tpu_custom_call.1} parent=11 // pred_check
          %p299 = pneg %p85
        $region14: #{tpu_custom_call.1} parent=11 // pred_check_branch
          %301 = sbr.rel (%p299) target = $region16
        $region15: #{tpu_custom_call.1} parent=11 // pred_region
          %s303 = ssub.s32 4096, 4096
          %304 = vsyncadd [#allocation7], %s303
          %s305 = sshll.u32 [#allocation6], 4
          %s306 = int_to_ptr.vmem [resolvable:$true] %s305
          %311 = dma.hbm_to_vmem [thread:$0]  %s1, 4096, %s306, [#allocation7], 64, 64, 4
        $region16: #{tpu_custom_call.1} parent=11 // pred_fallthru
          _
        // Predicated region
        $region17: #{tpu_custom_call.1} parent=11 // pred_check
          %p312 = pneg %p106
        $region18: #{tpu_custom_call.1} parent=11 // pred_check_branch
          %314 = sbr.rel (%p312) target = $region20
        $region19: #{tpu_custom_call.1} parent=11 // pred_region
          _
        $region20: #{tpu_custom_call.1} parent=11 // pred_fallthru
          _
        // Predicated region
        $region21: #{tpu_custom_call.1} parent=11 // pred_check
          %p315 = pneg %p153
        $region22: #{tpu_custom_call.1} parent=11 // pred_check_branch
          %317 = sbr.rel (%p315) target = $region24
        $region23: #{tpu_custom_call.1} parent=11 // pred_region
          %s319 = ssub.s32 512, 512
          %320 = vsyncadd [#allocation7], %s319
          %s321 = sshll.u32 [#allocation8], 4
          %s322 = int_to_ptr.vmem [resolvable:$true] %s321
          %327 = dma.hbm_to_vmem [thread:$0]  %s4, 512, %s322, [#allocation7], 128, 128, 8
        $region24: #{tpu_custom_call.1} parent=11 // pred_fallthru
          _
        // Predicated region
        $region25: #{tpu_custom_call.1} parent=11 // pred_check
          %p328 = pneg %p174
        $region26: #{tpu_custom_call.1} parent=11 // pred_check_branch
          %330 = sbr.rel (%p328) target = $region28
        $region27: #{tpu_custom_call.1} parent=11 // pred_region
          _
        $region28: #{tpu_custom_call.1} parent=11 // pred_fallthru
          _
        // Predicated region
        $region29: #{tpu_custom_call.1} parent=11 // pred_check
          %p331 = pneg %p195
        $region30: #{tpu_custom_call.1} parent=11 // pred_check_branch
          %333 = sbr.rel (%p331) target = $region32
        $region31: #{tpu_custom_call.1} parent=11 // pred_region
          %s335 = ssub.s32 4096, 4096
          %336 = vsyncadd [#allocation10], %s335
          %s337 = sshll.u32 [#allocation9], 4
          %s338 = int_to_ptr.vmem [resolvable:$true] %s337
          %343 = dma.hbm_to_vmem [thread:$0]  %s6, 4096, %s338, [#allocation10], 128, 128, 8
        $region32: #{tpu_custom_call.1} parent=11 // pred_fallthru
          _
        // Predicated region
        $region33: #{tpu_custom_call.1} parent=11 // pred_check
          %p344 = pneg %p216
        $region34: #{tpu_custom_call.1} parent=11 // pred_check_branch
          %346 = sbr.rel (%p344) target = $region36
        $region35: #{tpu_custom_call.1} parent=11 // pred_region
          _
        $region36: #{tpu_custom_call.1} parent=11 // pred_fallthru
          _
        // Predicated region
        $region37: #{tpu_custom_call.1} parent=11 // pred_check
          %p347 = pneg %p237
        $region38: #{tpu_custom_call.1} parent=11 // pred_check_branch
          %349 = sbr.rel (%p347) target = $region40
        $region39: #{tpu_custom_call.1} parent=11 // pred_region
          %s351 = ssub.s32 6144, 6144
          %352 = vsyncadd [#allocation10], %s351
          %s353 = sshll.u32 [#allocation11], 4
          %s354 = int_to_ptr.vmem [resolvable:$true] %s353
          %359 = dma.hbm_to_vmem [thread:$0]  %s8, 6144, %s354, [#allocation10], 128, 128, 8
        $region40: #{tpu_custom_call.1} parent=11 // pred_fallthru
          _
        // Predicated region
        $region41: #{tpu_custom_call.1} parent=11 // pred_check
          %p360 = pneg %p258
        $region42: #{tpu_custom_call.1} parent=11 // pred_check_branch
          %362 = sbr.rel (%p360) target = $region44
        $region43: #{tpu_custom_call.1} parent=11 // pred_region
          _
        $region44: #{tpu_custom_call.1} parent=11 // pred_fallthru
          _
      $region12: #{tpu_custom_call.1} parent=5 // pred_fallthru
        _
      %p363 = scmp.lt.s32.totalorder %s24, 2
      // Predicated region
      $region45: #{tpu_custom_call.1} parent=5 // pred_check
        %p364 = pneg %p363
      $region46: #{tpu_custom_call.1} parent=5 // pred_check_branch
        %366 = sbr.rel (%p364) target = $region48
      $region47: #{tpu_custom_call.1} parent=5 // pred_region
        // Predicated region
        $region49: #{tpu_custom_call.1} parent=47 // pred_check
          %p367 = pneg %p58
        $region50: #{tpu_custom_call.1} parent=47 // pred_check_branch
          %369 = sbr.rel (%p367) target = $region52
        $region51: #{tpu_custom_call.1} parent=47 // pred_region
          %s370 = sand.u32 %s48, 1
          %s371 = scalar_lea.sflag [#allocation4], %s370
          %s372 = sand.u32 %s48, 1
          %s373 = smul.addr %s372, 16
          %s374 = scalar_lea.vmem [#allocation3], %s373
          %s376 = ssub.s32 256, 256
          %377 = vsyncadd %s371, %s376
          %s378 = smul.addr %s32, 4
          %s379 = smul.addr %s31, 4
          %s380 = sadd.s32 %s378, %s379
          %s381 = smul.addr %s380, 64
          %s382 = scalar_lea.hbm %s0, %s381
          %s384 = sshll.u32 %s374, 4
          %s385 = int_to_ptr.vmem [resolvable:$true] %s384
          %387 = dma.hbm_to_vmem [thread:$0]  %s382, 256, %s385, %s371
        $region52: #{tpu_custom_call.1} parent=47 // pred_fallthru
          _
        // Predicated region
        $region53: #{tpu_custom_call.1} parent=47 // pred_check
          %p388 = pneg %p126
        $region54: #{tpu_custom_call.1} parent=47 // pred_check_branch
          %390 = sbr.rel (%p388) target = $region56
        $region55: #{tpu_custom_call.1} parent=47 // pred_region
          %p391 = scmp.lt.s32.totalorder %s31, 1
          %s392 = scalar_select %p391, %s31, 1
          %s393 = scalar_lea.vmem %s3, %s392
        $region56: #{tpu_custom_call.1} parent=47 // pred_fallthru
          _
      $region48: #{tpu_custom_call.1} parent=5 // pred_fallthru
        _
      %p394 = scmp.le.s32.totalorder 1, %s24
      %p395 = scmp.lt.s32.totalorder %s24, 3
      %p396 = pnand %p394, %p395
      %p397 = pneg %p396
      // Predicated region
      $region57: #{tpu_custom_call.1} parent=5 // pred_check
        _
      $region58: #{tpu_custom_call.1} parent=5 // pred_check_branch
        %399 = sbr.rel (%p396) target = $region60
      $region59: #{tpu_custom_call.1} parent=5 // pred_region
        %s400 = ssub.s32 %s24, 1
        %s401 = sand.u32 %s51, 1
        %s402 = scalar_lea.sflag [#allocation4], %s401
        %s403 = sand.u32 %s51, 1
        %s404 = smul.addr %s403, 16
        %s405 = scalar_lea.vmem [#allocation3], %s404
        // Predicated region
        $region61: #{tpu_custom_call.1} parent=59 // pred_check
          %p406 = pneg %p64
        $region62: #{tpu_custom_call.1} parent=59 // pred_check_branch
          %408 = sbr.rel (%p406) target = $region64
        $region63: #{tpu_custom_call.1} parent=59 // pred_region
          %409 = dma.done %s402, 256
        $region64: #{tpu_custom_call.1} parent=59 // pred_fallthru
          _
        // Predicated region
        $region65: #{tpu_custom_call.1} parent=59 // pred_check
          %p410 = pneg %p85
        $region66: #{tpu_custom_call.1} parent=59 // pred_check_branch
          %412 = sbr.rel (%p410) target = $region68
        $region67: #{tpu_custom_call.1} parent=59 // pred_region
          %413 = dma.done [#allocation7], 4096
        $region68: #{tpu_custom_call.1} parent=59 // pred_fallthru
          _
        // Predicated region
        $region69: #{tpu_custom_call.1} parent=59 // pred_check
          %p414 = pneg %p153
        $region70: #{tpu_custom_call.1} parent=59 // pred_check_branch
          %416 = sbr.rel (%p414) target = $region72
        $region71: #{tpu_custom_call.1} parent=59 // pred_region
          %417 = dma.done [#allocation7], 512
        $region72: #{tpu_custom_call.1} parent=59 // pred_fallthru
          _
        // Predicated region
        $region73: #{tpu_custom_call.1} parent=59 // pred_check
          %p418 = pneg %p195
        $region74: #{tpu_custom_call.1} parent=59 // pred_check_branch
          %420 = sbr.rel (%p418) target = $region76
        $region75: #{tpu_custom_call.1} parent=59 // pred_region
          %421 = dma.done [#allocation10], 4096
        $region76: #{tpu_custom_call.1} parent=59 // pred_fallthru
          _
        // Predicated region
        $region77: #{tpu_custom_call.1} parent=59 // pred_check
          %p422 = pneg %p237
        $region78: #{tpu_custom_call.1} parent=59 // pred_check_branch
          %424 = sbr.rel (%p422) target = $region80
        $region79: #{tpu_custom_call.1} parent=59 // pred_region
          %425 = dma.done [#allocation10], 6144
        $region80: #{tpu_custom_call.1} parent=59 // pred_fallthru
          _
        %s426 = sand.u32 %s51, 1
        %s427 = scalar_lea.sflag [#allocation4], %s426
        %s428 = sand.u32 %s51, 1
        %s429 = smul.addr %s428, 16
        %s430 = scalar_lea.vmem [#allocation3], %s429
        %p431 = pneg %p64
        %p432 = pneg %p61
        %p433 = pneg %p85
        %p434 = pneg %p82
        %p435 = pneg %p106
        %p436 = pneg %p103
        %p437 = scmp.lt.s32.totalorder %s33, 1
        %s438 = scalar_select %p437, %s33, 1
        %s439 = scalar_lea.vmem %s3, %s438
        %p440 = pneg %p132
        %p441 = pneg %p129
        %p442 = pneg %p153
        %p443 = pneg %p150
        %p444 = pneg %p174
        %p445 = pneg %p171
        %p446 = pneg %p195
        %p447 = pneg %p192
        %p448 = pneg %p216
        %p449 = pneg %p213
        %p450 = pneg %p237
        %p451 = pneg %p234
        %p452 = pneg %p258
        %p453 = pneg %p255
        %p454 = pneg %p284
        %p455 = pneg %p281
        %s456 = sand.u32 %s271, 1
        %s457 = scalar_lea.sflag [#allocation5], %s456
        %s458 = sand.u32 %s271, 1
        %s459 = scalar_lea.vmem [#allocation12], %s458
        %p460 = scmp.lt.s32.totalorder %s33, 1
        %s461 = scalar_select %p460, %s33, 1
        %s462 = scalar_lea.vmem %s3, %s461
        %p464 = scmp.eq.s32.totalorder %s34, 0
        // Predicated region
        $region81: #{tpu_custom_call.1} parent=59 // pred_check
          %p465 = pneg %p464
        $region82: #{tpu_custom_call.1} parent=59 // pred_check_branch
          %467 = sbr.rel (%p465) target = $region84
        $region83: #{tpu_custom_call.1} parent=59 // pred_region
          %v468 = vlaneseq
          %vm469 = vcmp.ge.s32.totalorder %v468, 0
          %vm470 = vcmp.lt.s32.totalorder %v468, 384
          %vm471 = vmand %vm469, %vm470
          %472 = vst.msk [vmem:[#allocation2] sm:$0x7] %vm471, 0.0
        $region84: #{tpu_custom_call.1} parent=59 // pred_fallthru
          _
        %v473 = vld [vmem:[%s405] sm:$0xff]
        %v474 = vld [vmem:[%s405 + $0x8] sm:$0xff]
        %v475 = vld [vmem:[#allocation6] sm:$0xf]
        %v476 = vld [vmem:[#allocation6 + $0x4] sm:$0xf]
        %v477 = vld [vmem:[#allocation6 + $0x8] sm:$0xf]
        %v478 = vld [vmem:[#allocation6 + $0xc] sm:$0xf]
        %v479 = vld [vmem:[#allocation6 + $0x10] sm:$0xf]
        %v480 = vld [vmem:[#allocation6 + $0x14] sm:$0xf]
        %v481 = vld [vmem:[#allocation6 + $0x18] sm:$0xf]
        %v482 = vld [vmem:[#allocation6 + $0x1c] sm:$0xf]
        %v483 = vld [vmem:[#allocation6 + $0x20] sm:$0xf]
        %v484 = vld [vmem:[#allocation6 + $0x24] sm:$0xf]
        %v485 = vld [vmem:[#allocation6 + $0x28] sm:$0xf]
        %v486 = vld [vmem:[#allocation6 + $0x2c] sm:$0xf]
        %v487 = vld [vmem:[#allocation6 + $0x30] sm:$0xf]
        %v488 = vld [vmem:[#allocation6 + $0x34] sm:$0xf]
        %v489 = vld [vmem:[#allocation6 + $0x38] sm:$0xf]
        %v490 = vld [vmem:[#allocation6 + $0x3c] sm:$0xf]
        %v491 = vld [vmem:[#allocation6 + $0x40] sm:$0xf]
        %v492 = vld [vmem:[#allocation6 + $0x44] sm:$0xf]
        %v493 = vld [vmem:[#allocation6 + $0x48] sm:$0xf]
        %v494 = vld [vmem:[#allocation6 + $0x4c] sm:$0xf]
        %v495 = vld [vmem:[#allocation6 + $0x50] sm:$0xf]
        %v496 = vld [vmem:[#allocation6 + $0x54] sm:$0xf]
        %v497 = vld [vmem:[#allocation6 + $0x58] sm:$0xf]
        %v498 = vld [vmem:[#allocation6 + $0x5c] sm:$0xf]
        %v499 = vld [vmem:[#allocation6 + $0x60] sm:$0xf]
        %v500 = vld [vmem:[#allocation6 + $0x64] sm:$0xf]
        %v501 = vld [vmem:[#allocation6 + $0x68] sm:$0xf]
        %v502 = vld [vmem:[#allocation6 + $0x6c] sm:$0xf]
        %v503 = vld [vmem:[#allocation6 + $0x70] sm:$0xf]
        %v504 = vld [vmem:[#allocation6 + $0x74] sm:$0xf]
        %v505 = vld [vmem:[#allocation6 + $0x78] sm:$0xf]
        %v506 = vld [vmem:[#allocation6 + $0x7c] sm:$0xf]
        %v507 = vld [vmem:[#allocation6 + $0x80] sm:$0xf]
        %v508 = vld [vmem:[#allocation6 + $0x84] sm:$0xf]
        %v509 = vld [vmem:[#allocation6 + $0x88] sm:$0xf]
        %v510 = vld [vmem:[#allocation6 + $0x8c] sm:$0xf]
        %v511 = vld [vmem:[#allocation6 + $0x90] sm:$0xf]
        %v512 = vld [vmem:[#allocation6 + $0x94] sm:$0xf]
        %v513 = vld [vmem:[#allocation6 + $0x98] sm:$0xf]
        %v514 = vld [vmem:[#allocation6 + $0x9c] sm:$0xf]
        %v515 = vld [vmem:[#allocation6 + $0xa0] sm:$0xf]
        %v516 = vld [vmem:[#allocation6 + $0xa4] sm:$0xf]
        %v517 = vld [vmem:[#allocation6 + $0xa8] sm:$0xf]
        %v518 = vld [vmem:[#allocation6 + $0xac] sm:$0xf]
        %v519 = vld [vmem:[#allocation6 + $0xb0] sm:$0xf]
        %v520 = vld [vmem:[#allocation6 + $0xb4] sm:$0xf]
        %v521 = vld [vmem:[#allocation6 + $0xb8] sm:$0xf]
        %v522 = vld [vmem:[#allocation6 + $0xbc] sm:$0xf]
        %v523 = vld [vmem:[#allocation6 + $0xc0] sm:$0xf]
        %v524 = vld [vmem:[#allocation6 + $0xc4] sm:$0xf]
        %v525 = vld [vmem:[#allocation6 + $0xc8] sm:$0xf]
        %v526 = vld [vmem:[#allocation6 + $0xcc] sm:$0xf]
        %v527 = vld [vmem:[#allocation6 + $0xd0] sm:$0xf]
        %v528 = vld [vmem:[#allocation6 + $0xd4] sm:$0xf]
        %v529 = vld [vmem:[#allocation6 + $0xd8] sm:$0xf]
        %v530 = vld [vmem:[#allocation6 + $0xdc] sm:$0xf]
        %v531 = vld [vmem:[#allocation6 + $0xe0] sm:$0xf]
        %v532 = vld [vmem:[#allocation6 + $0xe4] sm:$0xf]
        %v533 = vld [vmem:[#allocation6 + $0xe8] sm:$0xf]
        %v534 = vld [vmem:[#allocation6 + $0xec] sm:$0xf]
        %v535 = vld [vmem:[#allocation6 + $0xf0] sm:$0xf]
        %v536 = vld [vmem:[#allocation6 + $0xf4] sm:$0xf]
        %v537 = vld [vmem:[#allocation6 + $0xf8] sm:$0xf]
        %v538 = vld [vmem:[#allocation6 + $0xfc] sm:$0xf]
        %v539 = vld [vmem:[%s2] sm:$0x1]
        %v541 = vlaneseq
        %v542 = vshrl.u32 %v541, 7
        %v543 = vsub.s32 0, %v542
        %v544 = vrot.slane %v539, %v543
        %v548 = vunpack.c.l.b16 %v473
        %v549 = vunpack.c.h.b16 %v473
        %v550 = vunpack.c.l.b16 %v474
        %v551 = vunpack.c.h.b16 %v474
        %v552 = vpack.c.b16 %v548, %v548
        %v553 = vpack.c.b16 %v549, %v549
        %v554 = vpack.c.b16 %v550, %v550
        %v555 = vpack.c.b16 %v551, %v551
        %v624 = vunpack.c.l.b16 %v475
        %v625 = vunpack.c.l.b16 %v476
        %v626 = vunpack.c.l.b16 %v477
        %v627 = vunpack.c.l.b16 %v478
        %v628 = vunpack.c.l.b16 %v479
        %v629 = vunpack.c.l.b16 %v480
        %v630 = vunpack.c.l.b16 %v481
        %v631 = vunpack.c.l.b16 %v482
        %v632 = vunpack.c.l.b16 %v483
        %v633 = vunpack.c.l.b16 %v484
        %v634 = vunpack.c.l.b16 %v485
        %v635 = vunpack.c.l.b16 %v486
        %v636 = vunpack.c.l.b16 %v487
        %v637 = vunpack.c.l.b16 %v488
        %v638 = vunpack.c.l.b16 %v489
        %v639 = vunpack.c.l.b16 %v490
        %v640 = vunpack.c.l.b16 %v491
        %v641 = vunpack.c.l.b16 %v492
        %v642 = vunpack.c.l.b16 %v493
        %v643 = vunpack.c.l.b16 %v494
        %v644 = vunpack.c.l.b16 %v495
        %v645 = vunpack.c.l.b16 %v496
        %v646 = vunpack.c.l.b16 %v497
        %v647 = vunpack.c.l.b16 %v498
        %v648 = vunpack.c.l.b16 %v499
        %v649 = vunpack.c.l.b16 %v500
        %v650 = vunpack.c.l.b16 %v501
        %v651 = vunpack.c.l.b16 %v502
        %v652 = vunpack.c.l.b16 %v503
        %v653 = vunpack.c.l.b16 %v504
        %v654 = vunpack.c.l.b16 %v505
        %v655 = vunpack.c.l.b16 %v506
        %v656 = vunpack.c.l.b16 %v507
        %v657 = vunpack.c.l.b16 %v508
        %v658 = vunpack.c.l.b16 %v509
        %v659 = vunpack.c.l.b16 %v510
        %v660 = vunpack.c.l.b16 %v511
        %v661 = vunpack.c.l.b16 %v512
        %v662 = vunpack.c.l.b16 %v513
        %v663 = vunpack.c.l.b16 %v514
        %v664 = vunpack.c.l.b16 %v515
        %v665 = vunpack.c.l.b16 %v516
        %v666 = vunpack.c.l.b16 %v517
        %v667 = vunpack.c.l.b16 %v518
        %v668 = vunpack.c.l.b16 %v519
        %v669 = vunpack.c.l.b16 %v520
        %v670 = vunpack.c.l.b16 %v521
        %v671 = vunpack.c.l.b16 %v522
        %v672 = vunpack.c.l.b16 %v523
        %v673 = vunpack.c.l.b16 %v524
        %v674 = vunpack.c.l.b16 %v525
        %v675 = vunpack.c.l.b16 %v526
        %v676 = vunpack.c.l.b16 %v527
        %v677 = vunpack.c.l.b16 %v528
        %v678 = vunpack.c.l.b16 %v529
        %v679 = vunpack.c.l.b16 %v530
        %v680 = vunpack.c.l.b16 %v531
        %v681 = vunpack.c.l.b16 %v532
        %v682 = vunpack.c.l.b16 %v533
        %v683 = vunpack.c.l.b16 %v534
        %v684 = vunpack.c.l.b16 %v535
        %v685 = vunpack.c.l.b16 %v536
        %v686 = vunpack.c.l.b16 %v537
        %v687 = vunpack.c.l.b16 %v538
        %v688 = vpack.c.b16 %v625, %v624
        %v689 = vpack.c.b16 %v627, %v626
        %v690 = vpack.c.b16 %v629, %v628
        %v691 = vpack.c.b16 %v631, %v630
        %v692 = vpack.c.b16 %v633, %v632
        %v693 = vpack.c.b16 %v635, %v634
        %v694 = vpack.c.b16 %v637, %v636
        %v695 = vpack.c.b16 %v639, %v638
        %v696 = vpack.c.b16 %v641, %v640
        %v697 = vpack.c.b16 %v643, %v642
        %v698 = vpack.c.b16 %v645, %v644
        %v699 = vpack.c.b16 %v647, %v646
        %v700 = vpack.c.b16 %v649, %v648
        %v701 = vpack.c.b16 %v651, %v650
        %v702 = vpack.c.b16 %v653, %v652
        %v703 = vpack.c.b16 %v655, %v654
        %v704 = vpack.c.b16 %v657, %v656
        %v705 = vpack.c.b16 %v659, %v658
        %v706 = vpack.c.b16 %v661, %v660
        %v707 = vpack.c.b16 %v663, %v662
        %v708 = vpack.c.b16 %v665, %v664
        %v709 = vpack.c.b16 %v667, %v666
        %v710 = vpack.c.b16 %v669, %v668
        %v711 = vpack.c.b16 %v671, %v670
        %v712 = vpack.c.b16 %v673, %v672
        %v713 = vpack.c.b16 %v675, %v674
        %v714 = vpack.c.b16 %v677, %v676
        %v715 = vpack.c.b16 %v679, %v678
        %v716 = vpack.c.b16 %v681, %v680
        %v717 = vpack.c.b16 %v683, %v682
        %v718 = vpack.c.b16 %v685, %v684
        %v719 = vpack.c.b16 %v687, %v686
        %752 = vmatprep.subr.bf16.mxu0 0
        %753 = vmatpush1.bf16.msra.mxu0 %v688
        %754 = vmatprep.subr.bf16.mxu0 0
        %755 = vmatpush1.bf16.msra.mxu0 %v689
        %756 = vmatprep.subr.bf16.mxu0 0
        %757 = vmatpush1.bf16.msra.mxu0 %v690
        %758 = vmatprep.subr.bf16.mxu0 0
        %759 = vmatpush1.bf16.msra.mxu0 %v691
        %760 = vmatprep.subr.bf16.mxu0 0
        %761 = vmatpush1.bf16.msra.mxu0 %v692
        %762 = vmatprep.subr.bf16.mxu0 0
        %763 = vmatpush1.bf16.msra.mxu0 %v693
        %764 = vmatprep.subr.bf16.mxu0 0
        %765 = vmatpush1.bf16.msra.mxu0 %v694
        %766 = vmatprep.subr.bf16.mxu0 0
        %767 = vmatpush1.bf16.msra.mxu0 %v695
        %768 = vmatprep.subr.bf16.mxu0 0
        %769 = vmatpush1.bf16.msra.mxu0 %v696
        %770 = vmatprep.subr.bf16.mxu0 0
        %771 = vmatpush1.bf16.msra.mxu0 %v697
        %772 = vmatprep.subr.bf16.mxu0 0
        %773 = vmatpush1.bf16.msra.mxu0 %v698
        %774 = vmatprep.subr.bf16.mxu0 0
        %775 = vmatpush1.bf16.msra.mxu0 %v699
        %776 = vmatprep.subr.bf16.mxu0 0
        %777 = vmatpush1.bf16.msra.mxu0 %v700
        %778 = vmatprep.subr.bf16.mxu0 0
        %779 = vmatpush1.bf16.msra.mxu0 %v701
        %780 = vmatprep.subr.bf16.mxu0 0
        %781 = vmatpush1.bf16.msra.mxu0 %v702
        %782 = vmatprep.subr.bf16.mxu0 0
        %783 = vmatpush1.bf16.msra.mxu0 %v703
        %784 = vmatprep.mubr.bf16.mxu0 %v553
        %785 = vmatmul.mubr.bf16.gmra.mrb[0].mxu0 %v552
        %v786 = vpop.f32.mrb[0].mxu0
        %v787 = vadd.f32 %v544, %v786
        %v788 = vpop.f32.mrb[0].mxu0
        %v789 = vpop.f32.mrb[0].mxu0
        %v790 = vpop.f32.mrb[0].mxu0
        %791 = vdwg.mxu0
        %792 = vmatprep.subr.bf16.mxu0 0
        %793 = vmatpush1.bf16.msra.mxu0 %v704
        %794 = vmatprep.subr.bf16.mxu0 0
        %795 = vmatpush1.bf16.msra.mxu0 %v705
        %796 = vmatprep.subr.bf16.mxu0 0
        %797 = vmatpush1.bf16.msra.mxu0 %v706
        %798 = vmatprep.subr.bf16.mxu0 0
        %799 = vmatpush1.bf16.msra.mxu0 %v707
        %800 = vmatprep.subr.bf16.mxu0 0
        %801 = vmatpush1.bf16.msra.mxu0 %v708
        %802 = vmatprep.subr.bf16.mxu0 0
        %803 = vmatpush1.bf16.msra.mxu0 %v709
        %804 = vmatprep.subr.bf16.mxu0 0
        %805 = vmatpush1.bf16.msra.mxu0 %v710
        %806 = vmatprep.subr.bf16.mxu0 0
        %807 = vmatpush1.bf16.msra.mxu0 %v711
        %808 = vmatprep.subr.bf16.mxu0 0
        %809 = vmatpush1.bf16.msra.mxu0 %v712
        %810 = vmatprep.subr.bf16.mxu0 0
        %811 = vmatpush1.bf16.msra.mxu0 %v713
        %812 = vmatprep.subr.bf16.mxu0 0
        %813 = vmatpush1.bf16.msra.mxu0 %v714
        %814 = vmatprep.subr.bf16.mxu0 0
        %815 = vmatpush1.bf16.msra.mxu0 %v715
        %816 = vmatprep.subr.bf16.mxu0 0
        %817 = vmatpush1.bf16.msra.mxu0 %v716
        %818 = vmatprep.subr.bf16.mxu0 0
        %819 = vmatpush1.bf16.msra.mxu0 %v717
        %820 = vmatprep.subr.bf16.mxu0 0
        %821 = vmatpush1.bf16.msra.mxu0 %v718
        %822 = vmatprep.subr.bf16.mxu0 0
        %823 = vmatpush1.bf16.msra.mxu0 %v719
        %824 = vmatprep.mubr.bf16.mxu0 %v555
        %825 = vmatmul.mubr.bf16.gmra.mrb[0].mxu0 %v554
        %v826 = vpop.f32.mrb[0].mxu0
        %v827 = vadd.f32 %v787, %v826
        %v828 = vpop.f32.mrb[0].mxu0
        %v829 = vpop.f32.mrb[0].mxu0
        %v830 = vpop.f32.mrb[0].mxu0
        %831 = vdwg.mxu0
        %v832 = vmax.f32 %v827, 0.0
        %v833 = vld [vmem:[#allocation2] sm:$0x1]
        %v834 = vrot.slane %v832, 4
        %v835 = vadd.f32 %v832, %v834
        %v836 = vrot.slane %v835, 2
        %v837 = vadd.f32 %v835, %v836
        %v838 = vrot.slane %v837, 1
        %v839 = vadd.f32 %v837, %v838
        %v840 = vadd.f32 %v833, %v839
        %v841 = vlaneseq
        %vm842 = vcmp.ge.s32.totalorder %v841, 0
        %vm843 = vcmp.lt.s32.totalorder %v841, 128
        %vm844 = vmand %vm842, %vm843
        %845 = vst.msk [vmem:[#allocation2] sm:$0x1] %vm844, %v840
        // Predicated region
        $region85: #{tpu_custom_call.1} parent=59 // pred_check
          %p846 = pneg %p464
        $region86: #{tpu_custom_call.1} parent=59 // pred_check_branch
          %848 = sbr.rel (%p846) target = $region88
        $region87: #{tpu_custom_call.1} parent=59 // pred_region
          %v849 = vld [vmem:[#allocation2] sm:$0x1]
          %v850 = vmul.f32 %v849, 0.125
          %851 = vst.msk [vmem:[#allocation2] sm:$0x1] %vm844, %v850
          %v852 = vld [vmem:[%s462] sm:$0x1]
          %v853 = vld [vmem:[#allocation8] sm:$0xff]
          %v854 = vld [vmem:[#allocation8 + $0x8] sm:$0xff]
          %v855 = vld [vmem:[#allocation8 + $0x10] sm:$0xff]
          %v856 = vld [vmem:[#allocation8 + $0x18] sm:$0xff]
          %v857 = vld [vmem:[%s5] sm:$0x1]
          %vm858 = vcmask 261120
          %v860 = vsel %vm858, %v852, 0
          %862 = vmatprep.subr.mxu0 0.0
          %863 = vmatpush1.msra.mxu0 %v853
          %864 = vmatprep.subr.mxu0 0.0
          %865 = vmatpush1.msra.mxu0 %v854
          %866 = vmatprep.subr.mxu0 0.0
          %867 = vmatpush1.msra.mxu0 %v855
          %868 = vmatprep.subr.mxu0 0.0
          %869 = vmatpush1.msra.mxu0 %v856
          %870 = vmatprep.subr.mxu0 0.0
          %871 = vmatpush1.msra.mxu0 0.0
          %872 = vmatprep.subr.mxu0 0.0
          %873 = vmatpush1.msra.mxu0 0.0
          %874 = vmatprep.subr.mxu0 0.0
          %875 = vmatpush1.msra.mxu0 0.0
          %876 = vmatprep.subr.mxu0 0.0
          %877 = vmatpush1.msra.mxu0 0.0
          %878 = vmatprep.subr.mxu0 0.0
          %879 = vmatpush1.msra.mxu0 0.0
          %880 = vmatprep.subr.mxu0 0.0
          %881 = vmatpush1.msra.mxu0 0.0
          %882 = vmatprep.subr.mxu0 0.0
          %883 = vmatpush1.msra.mxu0 0.0
          %884 = vmatprep.subr.mxu0 0.0
          %885 = vmatpush1.msra.mxu0 0.0
          %886 = vmatprep.subr.mxu0 0.0
          %887 = vmatpush1.msra.mxu0 0.0
          %888 = vmatprep.subr.mxu0 0.0
          %889 = vmatpush1.msra.mxu0 0.0
          %890 = vmatprep.subr.mxu0 0.0
          %891 = vmatpush1.msra.mxu0 0.0
          %892 = vmatprep.subr.mxu0 0.0
          %893 = vmatpush1.msra.mxu0 0.0
          %894 = vmatprep.subr.mxu0 0.0
          %895 = vmatpush1.msra.mxu0 0.0
          %896 = vmatprep.subr.mxu0 0.0
          %897 = vmatpush1.msra.mxu0 0.0
          %898 = vmatprep.subr.mxu0 0.0
          %899 = vmatpush1.msra.mxu0 0.0
          %900 = vmatprep.subr.mxu0 0.0
          %901 = vmatpush1.msra.mxu0 0.0
          %902 = vmatprep.subr.mxu0 0.0
          %903 = vmatpush1.msra.mxu0 0.0
          %904 = vmatprep.subr.mxu0 0.0
          %905 = vmatpush1.msra.mxu0 0.0
          %906 = vmatprep.subr.mxu0 0.0
          %907 = vmatpush1.msra.mxu0 0.0
          %908 = vmatprep.subr.mxu0 0.0
          %909 = vmatpush1.msra.mxu0 0.0
          %910 = vmatprep.subr.mxu0 0.0
          %911 = vmatpush1.msra.mxu0 0.0
          %912 = vmatprep.subr.mxu0 0.0
          %913 = vmatpush1.msra.mxu0 0.0
          %914 = vmatprep.subr.mxu0 0.0
          %915 = vmatpush1.msra.mxu0 0.0
          %916 = vmatprep.subr.mxu0 0.0
          %917 = vmatpush1.msra.mxu0 0.0
          %918 = vmatprep.subr.mxu0 0.0
          %919 = vmatpush1.msra.mxu0 0.0
          %920 = vmatprep.subr.mxu0 0.0
          %921 = vmatpush1.msra.mxu0 0.0
          %922 = vmatprep.subr.mxu0 0.0
          %923 = vmatpush1.msra.mxu0 0.0
          %924 = vmatprep.subr.mxu0 0.0
          %925 = vmatpush1.msra.mxu0 0.0
          %926 = vmatprep.mubr.f32.mxu0 0.0
          %927 = vmatmul.mubr.f32.gmra.mrb[0].mxu0 %v860
          %v928 = vpop.f32.mrb[0].mxu0
          %v929 = vadd.f32 %v857, %v928
          %v930 = vpop.f32.mrb[0].mxu0
          %931 = vdwg.mxu0
          %v932 = vmax.f32 %v929, 0.0
          %933 = vst.msk [vmem:[#allocation2 + $0x1] sm:$0x1] %vm844, %v932
          %v934 = vld [vmem:[#allocation2] sm:$0x3]
          %v935 = vld [vmem:[#allocation9] sm:$0xff]
          %v936 = vld [vmem:[#allocation9 + $0x8] sm:$0xff]
          %v937 = vld [vmem:[#allocation9 + $0x10] sm:$0xff]
          %v938 = vld [vmem:[#allocation9 + $0x18] sm:$0xff]
          %v939 = vld [vmem:[#allocation9 + $0x20] sm:$0xff]
          %v940 = vld [vmem:[#allocation9 + $0x28] sm:$0xff]
          %v941 = vld [vmem:[#allocation9 + $0x30] sm:$0xff]
          %v942 = vld [vmem:[#allocation9 + $0x38] sm:$0xff]
          %v943 = vld [vmem:[#allocation9 + $0x40] sm:$0xff]
          %v944 = vld [vmem:[#allocation9 + $0x48] sm:$0xff]
          %v945 = vld [vmem:[#allocation9 + $0x50] sm:$0xff]
          %v946 = vld [vmem:[#allocation9 + $0x58] sm:$0xff]
          %v947 = vld [vmem:[#allocation9 + $0x60] sm:$0xff]
          %v948 = vld [vmem:[#allocation9 + $0x68] sm:$0xff]
          %v949 = vld [vmem:[#allocation9 + $0x70] sm:$0xff]
          %v950 = vld [vmem:[#allocation9 + $0x78] sm:$0xff]
          %v951 = vld [vmem:[#allocation9 + $0x80] sm:$0xff]
          %v952 = vld [vmem:[#allocation9 + $0x88] sm:$0xff]
          %v953 = vld [vmem:[#allocation9 + $0x90] sm:$0xff]
          %v954 = vld [vmem:[#allocation9 + $0x98] sm:$0xff]
          %v955 = vld [vmem:[#allocation9 + $0xa0] sm:$0xff]
          %v956 = vld [vmem:[#allocation9 + $0xa8] sm:$0xff]
          %v957 = vld [vmem:[#allocation9 + $0xb0] sm:$0xff]
          %v958 = vld [vmem:[#allocation9 + $0xb8] sm:$0xff]
          %v959 = vld [vmem:[#allocation9 + $0xc0] sm:$0xff]
          %v960 = vld [vmem:[#allocation9 + $0xc8] sm:$0xff]
          %v961 = vld [vmem:[#allocation9 + $0xd0] sm:$0xff]
          %v962 = vld [vmem:[#allocation9 + $0xd8] sm:$0xff]
          %v963 = vld [vmem:[#allocation9 + $0xe0] sm:$0xff]
          %v964 = vld [vmem:[#allocation9 + $0xe8] sm:$0xff]
          %v965 = vld [vmem:[#allocation9 + $0xf0] sm:$0xff]
          %v966 = vld [vmem:[#allocation9 + $0xf8] sm:$0xff]
          %v967 = vld [vmem:[%s7] sm:$0x1]
          %v969 = vlaneseq
          %v970 = vshrl.u32 %v969, 7
          %v971 = vsub.s32 0, %v970
          %v972 = vrot.slane %v934, %v971
          %v973 = vlaneseq
          %v974 = vshrl.u32 %v973, 7
          %v975 = vsub.s32 1, %v974
          %v976 = vrot.slane %v934, %v975
          %979 = vmatprep.subr.mxu0 0.0
          %980 = vmatpush1.msra.mxu0 %v935
          %981 = vmatprep.subr.mxu0 0.0
          %982 = vmatpush1.msra.mxu0 %v936
          %983 = vmatprep.subr.mxu0 0.0
          %984 = vmatpush1.msra.mxu0 %v937
          %985 = vmatprep.subr.mxu0 0.0
          %986 = vmatpush1.msra.mxu0 %v938
          %987 = vmatprep.subr.mxu0 0.0
          %988 = vmatpush1.msra.mxu0 %v939
          %989 = vmatprep.subr.mxu0 0.0
          %990 = vmatpush1.msra.mxu0 %v940
          %991 = vmatprep.subr.mxu0 0.0
          %992 = vmatpush1.msra.mxu0 %v941
          %993 = vmatprep.subr.mxu0 0.0
          %994 = vmatpush1.msra.mxu0 %v942
          %995 = vmatprep.subr.mxu0 0.0
          %996 = vmatpush1.msra.mxu0 %v943
          %997 = vmatprep.subr.mxu0 0.0
          %998 = vmatpush1.msra.mxu0 %v944
          %999 = vmatprep.subr.mxu0 0.0
          %1000 = vmatpush1.msra.mxu0 %v945
          %1001 = vmatprep.subr.mxu0 0.0
          %1002 = vmatpush1.msra.mxu0 %v946
          %1003 = vmatprep.subr.mxu0 0.0
          %1004 = vmatpush1.msra.mxu0 %v947
          %1005 = vmatprep.subr.mxu0 0.0
          %1006 = vmatpush1.msra.mxu0 %v948
          %1007 = vmatprep.subr.mxu0 0.0
          %1008 = vmatpush1.msra.mxu0 %v949
          %1009 = vmatprep.subr.mxu0 0.0
          %1010 = vmatpush1.msra.mxu0 %v950
          %1011 = vmatprep.subr.mxu0 0.0
          %1012 = vmatpush1.msra.mxu0 %v951
          %1013 = vmatprep.subr.mxu0 0.0
          %1014 = vmatpush1.msra.mxu0 %v952
          %1015 = vmatprep.subr.mxu0 0.0
          %1016 = vmatpush1.msra.mxu0 %v953
          %1017 = vmatprep.subr.mxu0 0.0
          %1018 = vmatpush1.msra.mxu0 %v954
          %1019 = vmatprep.subr.mxu0 0.0
          %1020 = vmatpush1.msra.mxu0 %v955
          %1021 = vmatprep.subr.mxu0 0.0
          %1022 = vmatpush1.msra.mxu0 %v956
          %1023 = vmatprep.subr.mxu0 0.0
          %1024 = vmatpush1.msra.mxu0 %v957
          %1025 = vmatprep.subr.mxu0 0.0
          %1026 = vmatpush1.msra.mxu0 %v958
          %1027 = vmatprep.subr.mxu0 0.0
          %1028 = vmatpush1.msra.mxu0 %v959
          %1029 = vmatprep.subr.mxu0 0.0
          %1030 = vmatpush1.msra.mxu0 %v960
          %1031 = vmatprep.subr.mxu0 0.0
          %1032 = vmatpush1.msra.mxu0 %v961
          %1033 = vmatprep.subr.mxu0 0.0
          %1034 = vmatpush1.msra.mxu0 %v962
          %1035 = vmatprep.subr.mxu0 0.0
          %1036 = vmatpush1.msra.mxu0 %v963
          %1037 = vmatprep.subr.mxu0 0.0
          %1038 = vmatpush1.msra.mxu0 %v964
          %1039 = vmatprep.subr.mxu0 0.0
          %1040 = vmatpush1.msra.mxu0 %v965
          %1041 = vmatprep.subr.mxu0 0.0
          %1042 = vmatpush1.msra.mxu0 %v966
          %1043 = vmatprep.mubr.f32.mxu0 %v976
          %1044 = vmatmul.mubr.f32.gmra.mrb[0].mxu0 %v972
          %v1045 = vpop.f32.mrb[0].mxu0
          %v1046 = vadd.f32 %v967, %v1045
          %v1047 = vpop.f32.mrb[0].mxu0
          %1048 = vdwg.mxu0
          %v1049 = vtanh.pop %v1046
          %1050 = vst.msk [vmem:[#allocation2 + $0x2] sm:$0x1] %vm844, %v1049
          %v1051 = vld [vmem:[#allocation2] sm:$0x7]
          %v1052 = vld [vmem:[#allocation11] sm:$0xff]
          %v1053 = vld [vmem:[#allocation11 + $0x8] sm:$0xff]
          %v1054 = vld [vmem:[#allocation11 + $0x10] sm:$0xff]
          %v1055 = vld [vmem:[#allocation11 + $0x18] sm:$0xff]
          %v1056 = vld [vmem:[#allocation11 + $0x20] sm:$0xff]
          %v1057 = vld [vmem:[#allocation11 + $0x28] sm:$0xff]
          %v1058 = vld [vmem:[#allocation11 + $0x30] sm:$0xff]
          %v1059 = vld [vmem:[#allocation11 + $0x38] sm:$0xff]
          %v1060 = vld [vmem:[#allocation11 + $0x40] sm:$0xff]
          %v1061 = vld [vmem:[#allocation11 + $0x48] sm:$0xff]
          %v1062 = vld [vmem:[#allocation11 + $0x50] sm:$0xff]
          %v1063 = vld [vmem:[#allocation11 + $0x58] sm:$0xff]
          %v1064 = vld [vmem:[#allocation11 + $0x60] sm:$0xff]
          %v1065 = vld [vmem:[#allocation11 + $0x68] sm:$0xff]
          %v1066 = vld [vmem:[#allocation11 + $0x70] sm:$0xff]
          %v1067 = vld [vmem:[#allocation11 + $0x78] sm:$0xff]
          %v1068 = vld [vmem:[#allocation11 + $0x80] sm:$0xff]
          %v1069 = vld [vmem:[#allocation11 + $0x88] sm:$0xff]
          %v1070 = vld [vmem:[#allocation11 + $0x90] sm:$0xff]
          %v1071 = vld [vmem:[#allocation11 + $0x98] sm:$0xff]
          %v1072 = vld [vmem:[#allocation11 + $0xa0] sm:$0xff]
          %v1073 = vld [vmem:[#allocation11 + $0xa8] sm:$0xff]
          %v1074 = vld [vmem:[#allocation11 + $0xb0] sm:$0xff]
          %v1075 = vld [vmem:[#allocation11 + $0xb8] sm:$0xff]
          %v1076 = vld [vmem:[#allocation11 + $0xc0] sm:$0xff]
          %v1077 = vld [vmem:[#allocation11 + $0xc8] sm:$0xff]
          %v1078 = vld [vmem:[#allocation11 + $0xd0] sm:$0xff]
          %v1079 = vld [vmem:[#allocation11 + $0xd8] sm:$0xff]
          %v1080 = vld [vmem:[#allocation11 + $0xe0] sm:$0xff]
          %v1081 = vld [vmem:[#allocation11 + $0xe8] sm:$0xff]
          %v1082 = vld [vmem:[#allocation11 + $0xf0] sm:$0xff]
          %v1083 = vld [vmem:[#allocation11 + $0xf8] sm:$0xff]
          %v1084 = vld [vmem:[#allocation11 + $0x100] sm:$0xff]
          %v1085 = vld [vmem:[#allocation11 + $0x108] sm:$0xff]
          %v1086 = vld [vmem:[#allocation11 + $0x110] sm:$0xff]
          %v1087 = vld [vmem:[#allocation11 + $0x118] sm:$0xff]
          %v1088 = vld [vmem:[#allocation11 + $0x120] sm:$0xff]
          %v1089 = vld [vmem:[#allocation11 + $0x128] sm:$0xff]
          %v1090 = vld [vmem:[#allocation11 + $0x130] sm:$0xff]
          %v1091 = vld [vmem:[#allocation11 + $0x138] sm:$0xff]
          %v1092 = vld [vmem:[#allocation11 + $0x140] sm:$0xff]
          %v1093 = vld [vmem:[#allocation11 + $0x148] sm:$0xff]
          %v1094 = vld [vmem:[#allocation11 + $0x150] sm:$0xff]
          %v1095 = vld [vmem:[#allocation11 + $0x158] sm:$0xff]
          %v1096 = vld [vmem:[#allocation11 + $0x160] sm:$0xff]
          %v1097 = vld [vmem:[#allocation11 + $0x168] sm:$0xff]
          %v1098 = vld [vmem:[#allocation11 + $0x170] sm:$0xff]
          %v1099 = vld [vmem:[#allocation11 + $0x178] sm:$0xff]
          %v1100 = vld [vmem:[%s9] sm:$0x1]
          %v1102 = vlaneseq
          %v1103 = vshrl.u32 %v1102, 7
          %v1104 = vsub.s32 0, %v1103
          %v1105 = vrot.slane %v1051, %v1104
          %v1106 = vlaneseq
          %v1107 = vshrl.u32 %v1106, 7
          %v1108 = vsub.s32 1, %v1107
          %v1109 = vrot.slane %v1051, %v1108
          %v1110 = vlaneseq
          %v1111 = vshrl.u32 %v1110, 7
          %v1112 = vsub.s32 2, %v1111
          %v1113 = vrot.slane %v1051, %v1112
          %1117 = vmatprep.subr.mxu0 0.0
          %1118 = vmatpush1.msra.mxu0 %v1052
          %1119 = vmatprep.subr.mxu0 0.0
          %1120 = vmatpush1.msra.mxu0 %v1053
          %1121 = vmatprep.subr.mxu0 0.0
          %1122 = vmatpush1.msra.mxu0 %v1054
          %1123 = vmatprep.subr.mxu0 0.0
          %1124 = vmatpush1.msra.mxu0 %v1055
          %1125 = vmatprep.subr.mxu0 0.0
          %1126 = vmatpush1.msra.mxu0 %v1056
          %1127 = vmatprep.subr.mxu0 0.0
          %1128 = vmatpush1.msra.mxu0 %v1057
          %1129 = vmatprep.subr.mxu0 0.0
          %1130 = vmatpush1.msra.mxu0 %v1058
          %1131 = vmatprep.subr.mxu0 0.0
          %1132 = vmatpush1.msra.mxu0 %v1059
          %1133 = vmatprep.subr.mxu0 0.0
          %1134 = vmatpush1.msra.mxu0 %v1060
          %1135 = vmatprep.subr.mxu0 0.0
          %1136 = vmatpush1.msra.mxu0 %v1061
          %1137 = vmatprep.subr.mxu0 0.0
          %1138 = vmatpush1.msra.mxu0 %v1062
          %1139 = vmatprep.subr.mxu0 0.0
          %1140 = vmatpush1.msra.mxu0 %v1063
          %1141 = vmatprep.subr.mxu0 0.0
          %1142 = vmatpush1.msra.mxu0 %v1064
          %1143 = vmatprep.subr.mxu0 0.0
          %1144 = vmatpush1.msra.mxu0 %v1065
          %1145 = vmatprep.subr.mxu0 0.0
          %1146 = vmatpush1.msra.mxu0 %v1066
          %1147 = vmatprep.subr.mxu0 0.0
          %1148 = vmatpush1.msra.mxu0 %v1067
          %1149 = vmatprep.subr.mxu0 0.0
          %1150 = vmatpush1.msra.mxu0 %v1068
          %1151 = vmatprep.subr.mxu0 0.0
          %1152 = vmatpush1.msra.mxu0 %v1069
          %1153 = vmatprep.subr.mxu0 0.0
          %1154 = vmatpush1.msra.mxu0 %v1070
          %1155 = vmatprep.subr.mxu0 0.0
          %1156 = vmatpush1.msra.mxu0 %v1071
          %1157 = vmatprep.subr.mxu0 0.0
          %1158 = vmatpush1.msra.mxu0 %v1072
          %1159 = vmatprep.subr.mxu0 0.0
          %1160 = vmatpush1.msra.mxu0 %v1073
          %1161 = vmatprep.subr.mxu0 0.0
          %1162 = vmatpush1.msra.mxu0 %v1074
          %1163 = vmatprep.subr.mxu0 0.0
          %1164 = vmatpush1.msra.mxu0 %v1075
          %1165 = vmatprep.subr.mxu0 0.0
          %1166 = vmatpush1.msra.mxu0 %v1076
          %1167 = vmatprep.subr.mxu0 0.0
          %1168 = vmatpush1.msra.mxu0 %v1077
          %1169 = vmatprep.subr.mxu0 0.0
          %1170 = vmatpush1.msra.mxu0 %v1078
          %1171 = vmatprep.subr.mxu0 0.0
          %1172 = vmatpush1.msra.mxu0 %v1079
          %1173 = vmatprep.subr.mxu0 0.0
          %1174 = vmatpush1.msra.mxu0 %v1080
          %1175 = vmatprep.subr.mxu0 0.0
          %1176 = vmatpush1.msra.mxu0 %v1081
          %1177 = vmatprep.subr.mxu0 0.0
          %1178 = vmatpush1.msra.mxu0 %v1082
          %1179 = vmatprep.subr.mxu0 0.0
          %1180 = vmatpush1.msra.mxu0 %v1083
          %1181 = vmatprep.mubr.f32.mxu0 %v1109
          %1182 = vmatmul.mubr.f32.gmra.mrb[0].mxu0 %v1105
          %v1183 = vpop.f32.mrb[0].mxu0
          %v1184 = vadd.f32 %v1100, %v1183
          %v1185 = vpop.f32.mrb[0].mxu0
          %1186 = vdwg.mxu0
          %1187 = vmatprep.subr.mxu0 0.0
          %1188 = vmatpush1.msra.mxu0 %v1084
          %1189 = vmatprep.subr.mxu0 0.0
          %1190 = vmatpush1.msra.mxu0 %v1085
          %1191 = vmatprep.subr.mxu0 0.0
          %1192 = vmatpush1.msra.mxu0 %v1086
          %1193 = vmatprep.subr.mxu0 0.0
          %1194 = vmatpush1.msra.mxu0 %v1087
          %1195 = vmatprep.subr.mxu0 0.0
          %1196 = vmatpush1.msra.mxu0 %v1088
          %1197 = vmatprep.subr.mxu0 0.0
          %1198 = vmatpush1.msra.mxu0 %v1089
          %1199 = vmatprep.subr.mxu0 0.0
          %1200 = vmatpush1.msra.mxu0 %v1090
          %1201 = vmatprep.subr.mxu0 0.0
          %1202 = vmatpush1.msra.mxu0 %v1091
          %1203 = vmatprep.subr.mxu0 0.0
          %1204 = vmatpush1.msra.mxu0 %v1092
          %1205 = vmatprep.subr.mxu0 0.0
          %1206 = vmatpush1.msra.mxu0 %v1093
          %1207 = vmatprep.subr.mxu0 0.0
          %1208 = vmatpush1.msra.mxu0 %v1094
          %1209 = vmatprep.subr.mxu0 0.0
          %1210 = vmatpush1.msra.mxu0 %v1095
          %1211 = vmatprep.subr.mxu0 0.0
          %1212 = vmatpush1.msra.mxu0 %v1096
          %1213 = vmatprep.subr.mxu0 0.0
          %1214 = vmatpush1.msra.mxu0 %v1097
          %1215 = vmatprep.subr.mxu0 0.0
          %1216 = vmatpush1.msra.mxu0 %v1098
          %1217 = vmatprep.subr.mxu0 0.0
          %1218 = vmatpush1.msra.mxu0 %v1099
          %1219 = vmatprep.subr.mxu0 0.0
          %1220 = vmatpush1.msra.mxu0 0.0
          %1221 = vmatprep.subr.mxu0 0.0
          %1222 = vmatpush1.msra.mxu0 0.0
          %1223 = vmatprep.subr.mxu0 0.0
          %1224 = vmatpush1.msra.mxu0 0.0
          %1225 = vmatprep.subr.mxu0 0.0
          %1226 = vmatpush1.msra.mxu0 0.0
          %1227 = vmatprep.subr.mxu0 0.0
          %1228 = vmatpush1.msra.mxu0 0.0
          %1229 = vmatprep.subr.mxu0 0.0
          %1230 = vmatpush1.msra.mxu0 0.0
          %1231 = vmatprep.subr.mxu0 0.0
          %1232 = vmatpush1.msra.mxu0 0.0
          %1233 = vmatprep.subr.mxu0 0.0
          %1234 = vmatpush1.msra.mxu0 0.0
          %1235 = vmatprep.subr.mxu0 0.0
          %1236 = vmatpush1.msra.mxu0 0.0
          %1237 = vmatprep.subr.mxu0 0.0
          %1238 = vmatpush1.msra.mxu0 0.0
          %1239 = vmatprep.subr.mxu0 0.0
          %1240 = vmatpush1.msra.mxu0 0.0
          %1241 = vmatprep.subr.mxu0 0.0
          %1242 = vmatpush1.msra.mxu0 0.0
          %1243 = vmatprep.subr.mxu0 0.0
          %1244 = vmatpush1.msra.mxu0 0.0
          %1245 = vmatprep.subr.mxu0 0.0
          %1246 = vmatpush1.msra.mxu0 0.0
          %1247 = vmatprep.subr.mxu0 0.0
          %1248 = vmatpush1.msra.mxu0 0.0
          %1249 = vmatprep.subr.mxu0 0.0
          %1250 = vmatpush1.msra.mxu0 0.0
          %1251 = vmatprep.mubr.f32.mxu0 0.0
          %1252 = vmatmul.mubr.f32.gmra.mrb[0].mxu0 %v1113
          %v1253 = vpop.f32.mrb[0].mxu0
          %v1254 = vadd.f32 %v1184, %v1253
          %v1255 = vpop.f32.mrb[0].mxu0
          %1256 = vdwg.mxu0
          %1257 = vst [vmem:[%s459] sm:$0x1] %v1254
        $region88: #{tpu_custom_call.1} parent=59 // pred_fallthru
          _
        %s1258 = sand.u32 %s271, 1
        %s1259 = scalar_lea.sflag [#allocation5], %s1258
        %s1260 = sand.u32 %s271, 1
        %s1261 = scalar_lea.vmem [#allocation12], %s1260
        // Predicated region
        $region89: #{tpu_custom_call.1} parent=59 // pred_check
          %p1262 = pneg %p281
        $region90: #{tpu_custom_call.1} parent=59 // pred_check_branch
          %1264 = sbr.rel (%p1262) target = $region92
        $region91: #{tpu_custom_call.1} parent=59 // pred_region
          %s1266 = ssub.s32 16, 16
          %1267 = vsyncadd %s1259, %s1266
          %s1268 = smul.addr %s33, 16
          %s1269 = scalar_lea.hbm %s10, %s1268
          %s1271 = sshll.u32 %s1261, 4
          %s1272 = int_to_ptr.vmem [resolvable:$true] %s1271
          %1274 = dma.vmem_to_hbm [thread:$0]  %s1272, 16, %s1269, %s1259
        $region92: #{tpu_custom_call.1} parent=59 // pred_fallthru
          _
      $region60: #{tpu_custom_call.1} parent=5 // pred_fallthru
        _
      %p1275 = scmp.le.s32.totalorder 2, %s24
      // Predicated region
      $region93: #{tpu_custom_call.1} parent=5 // pred_check
        %p1276 = pneg %p1275
      $region94: #{tpu_custom_call.1} parent=5 // pred_check_branch
        %1278 = sbr.rel (%p1276) target = $region96
      $region95: #{tpu_custom_call.1} parent=5 // pred_region
        %s1279 = ssub.s32 %s24, 2
        // Predicated region
        $region97: #{tpu_custom_call.1} parent=95 // pred_check
          %p1280 = pneg %p287
        $region98: #{tpu_custom_call.1} parent=95 // pred_check_branch
          %1282 = sbr.rel (%p1280) target = $region100
        $region99: #{tpu_custom_call.1} parent=95 // pred_region
          %s1283 = sand.u32 %s272, 1
          %s1284 = scalar_lea.sflag [#allocation5], %s1283
          %s1285 = sand.u32 %s272, 1
          %s1286 = scalar_lea.vmem [#allocation12], %s1285
          %1287 = dma.done %s1284, 16
        $region100: #{tpu_custom_call.1} parent=95 // pred_fallthru
          _
      $region96: #{tpu_custom_call.1} parent=5 // pred_fallthru
        _
    $region6: #{tpu_custom_call.1} parent=1 // loop_footer
      %s28 = sadd.s32 1, %s24
    $region7: #{tpu_custom_call.1} parent=1 // loop_footer_branch
      %23 = sbr.rel target = $region3
    $region8: #{tpu_custom_call.1} parent=1 // loop_exit
      _
    %1288 = vsyncpa [#allocation4], 1
    %s1289 = scalar_lea.sflag [#allocation4], 1
    %1290 = vsyncpa %s1289, 1
    %1291 = vsyncpa [#allocation7], 1
    %1292 = vsyncpa [#allocation10], 1
    %1293 = vsyncpa [#allocation5], 1
    %s1294 = scalar_lea.sflag [#allocation5], 1
    %1295 = vsyncpa %s1294, 1

</llo_original>
